<compile_context>
chip_gen: v7x
topology: tpu7x:2x2x1
jax: 0.10.0
libtpu: 0.0.40
codegen_flags: <defaults>
</compile_context>

<pallas_src>
import functools
import math

import jax
import jax.numpy as jnp
from jax.experimental import pallas as pl
from jax.experimental.pallas import tpu as pltpu

BN_EPS = 1e-5


def _round_up(v, m):
    return ((v + m - 1) // m) * m


# ----------------------------------------------------------------------------
# Fused Conv2d + folded BatchNorm + ReLU kernel (one (M-tile, Cout) slab/step)
# ----------------------------------------------------------------------------
def _conv_bn_relu_kernel(x_ref, w_ref, shift_ref, o_ref, *,
                         kh, kw, stride, dil, tile_h, wout, k_pad, relu):
    """Refs (per grid step (b, t)):
      x_ref:     (Hp, Wp, Cin)          bf16  full padded image of batch elem b
                                              (same block for every t -> DMA'd once per b)
      w_ref:     (Kpad, Cout)           bf16  im2col weight, BN scale folded, K zero-padded
      shift_ref: (1, Cout)              f32   folded BN shift (+ conv bias)
      o_ref:     (TILE_H*Wout, Cout)    out   lane-dense output slab for rows
                                              [t*TILE_H, (t+1)*TILE_H) of batch elem b
    """
    cin = x_ref.shape[-1]
    k = kh * kw * cin
    m_tile = tile_h * wout

    # First padded-input row needed by this output-row tile.
    r0 = pl.multiple_of(pl.program_id(1) * (tile_h * stride), tile_h * stride)

    # im2col, assembled entirely in registers: one lane-axis concatenate of the
    # KH*KW taps (+ zero lanes up to Kpad) instead of KH*KW narrow masked stores.
    parts = []
    for i in range(kh):
        for j in range(kw):
            if stride == 1:
                patch = x_ref[pl.ds(r0 + i * dil, tile_h),
                              j * dil:j * dil + wout, :]
            else:
                # TODO(synk): for stride > 1 the stride selection would be
                # better expressed in the input BlockSpec index_map (sublane-
                # strided in-kernel reads cost XLU work).
                patch = x_ref[pl.ds(r0 + i * dil, tile_h, stride=stride),
                              pl.ds(j * dil, wout, stride=stride), :]
            parts.append(patch)                       # (tile_h, wout, cin)
    if k_pad != k:
        parts.append(jnp.zeros((tile_h, wout, k_pad - k), x_ref.dtype))
    col = jnp.concatenate(parts, axis=-1).reshape(m_tile, k_pad)

    # Single MXU matmul: bf16 x bf16 -> f32 accumulation.
    acc = jnp.dot(col, w_ref[...], preferred_element_type=jnp.float32)

    # Epilogue: folded shift (+ bias) and ReLU (BN scale already in the weight).
    y = acc + shift_ref[...]
    if relu:
        y = jnp.maximum(y, 0.0)
    o_ref[...] = y.astype(o_ref.dtype)


def fused_conv_bn_relu(x_nhwc, weight_hwio, scale, shift, *,
                       stride=1, padding=0, dilation=1, relu=True,
                       out_dtype=jnp.float32):
    """x_nhwc: (N,H,W,Cin) f32.  weight_hwio: (KH,KW,Cin,Cout).
    Returns (N,Hout,Wout,Cout) out_dtype."""
    n, h, w, cin = x_nhwc.shape
    kh, kw, _, cout = weight_hwio.shape
    pad = int(padding)
    hp, wp = h + 2 * pad, w + 2 * pad
    hout = (hp - dilation * (kh - 1) - 1) // stride + 1
    wout = (wp - dilation * (kw - 1) - 1) // stride + 1
    k = kh * kw * cin
    k_pad = _round_up(k, 128)          # lane-aligned contraction dim for the MXU
    m = n * hout * wout

    # Pick TILE_H: a divisor of Hout so output blocks tile exactly, with
    # TILE_H*Wout a multiple of 8 (sublane-aligned) and <= 512 rows per step.
    divs = [d for d in range(1, hout + 1)
            if hout % d == 0 and (d * wout) % 8 == 0]
    if not divs:
        # TODO(synk): odd Hout*Wout geometries would need a masked final tile.
        raise NotImplementedError("Hout/Wout geometry not supported by tiling")
    small = [d for d in divs if d * wout <= 512]
    tile_h = max(small) if small else min(divs)
    num_h = hout // tile_h
    tile_m = tile_h * wout

    # Halo padding done once on the (small, Cin-wide) bf16 input in the wrapper
    # -> no padded-input VMEM scratch and no in-kernel memsets.
    x_bf = x_nhwc.astype(jnp.bfloat16)
    if pad:
        x_bf = jnp.pad(x_bf, ((0, 0), (pad, pad), (pad, pad), (0, 0)))

    # Fold the BN scale into the weight columns in f32, then quantize to bf16
    # and zero-pad the contraction dim to Kpad.
    w_flat = weight_hwio.reshape(k, cout).astype(jnp.float32) * \
        scale.astype(jnp.float32)[None, :]
    w_p = jnp.zeros((k_pad, cout), jnp.bfloat16).at[:k, :].set(
        w_flat.astype(jnp.bfloat16))
    shift2 = shift.reshape(1, cout).astype(jnp.float32)

    kern = functools.partial(
        _conv_bn_relu_kernel, kh=kh, kw=kw, stride=stride, dil=dilation,
        tile_h=tile_h, wout=wout, k_pad=k_pad, relu=relu)

    # Explicit VMEM budget (v7x has only 64 MiB per TensorCore).
    in_bytes = hp * wp * cin * 2
    out_bytes = tile_m * cout * jnp.dtype(out_dtype).itemsize
    col_bytes = tile_m * k_pad * 2
    w_bytes = k_pad * cout * 2
    vmem_limit = int(min(max(2 * (in_bytes + out_bytes) + w_bytes
                             + 4 * col_bytes + (4 << 20), 16 << 20), 48 << 20))

    out2d = pl.pallas_call(
        kern,
        out_shape=jax.ShapeDtypeStruct((m, cout), out_dtype),
        grid=(n, num_h),
        in_specs=[
            # Full padded image of batch element b; block index is t-invariant
            # so it is only DMA'd when b changes.
            pl.BlockSpec((None, hp, wp, cin), lambda b, t: (b, 0, 0, 0)),
            pl.BlockSpec((k_pad, cout), lambda b, t: (0, 0)),
            pl.BlockSpec((1, cout), lambda b, t: (0, 0)),
        ],
        out_specs=pl.BlockSpec((tile_m, cout), lambda b, t: (b * num_h + t, 0)),
        compiler_params=pltpu.CompilerParams(
            dimension_semantics=("parallel", "parallel"),
            vmem_limit_bytes=vmem_limit),
    )(x_bf, w_p, shift2)

    return out2d.reshape(n, hout, wout, cout)


# ----------------------------------------------------------------------------
# BasicConv: parameters + forward (NCHW in / NCHW out, like PyTorch)
# ----------------------------------------------------------------------------
class BasicConv:
    def __init__(self, key, in_planes, out_planes, kernel_size, stride=1,
                 padding=0, dilation=1, groups=1, relu=True, bn=True, bias=False):
        if groups != 1:
            # TODO(synk): grouped convolution (groups > 1) not implemented.
            raise NotImplementedError("groups != 1 is not supported")
        self.stride, self.padding, self.dilation = stride, padding, dilation
        self.relu = relu
        self.out_channels = out_planes

        k_w, k_b = jax.random.split(key)
        fan_in = in_planes * kernel_size * kernel_size
        bound = 1.0 / math.sqrt(fan_in)
        # PyTorch Conv2d default init: U(-1/sqrt(fan_in), 1/sqrt(fan_in)), OIHW.
        w_oihw = jax.random.uniform(
            k_w, (out_planes, in_planes, kernel_size, kernel_size),
            jnp.float32, -bound, bound)
        self.weight = jnp.transpose(w_oihw, (2, 3, 1, 0))   # -> (KH, KW, Cin, Cout)
        b = (jax.random.uniform(k_b, (out_planes,), jnp.float32, -bound, bound)
             if bias else None)

        # Eval-mode BatchNorm2d with default parameters/buffers, folded into
        # a per-channel scale (applied to the weight) and shift (epilogue).
        if bn:
            gamma = jnp.ones((out_planes,), jnp.float32)
            beta = jnp.zeros((out_planes,), jnp.float32)
            r_mean = jnp.zeros((out_planes,), jnp.float32)
            r_var = jnp.ones((out_planes,), jnp.float32)
            inv = gamma * jax.lax.rsqrt(r_var + BN_EPS)
            self.scale = inv
            self.shift = beta - r_mean * inv
        else:
            self.scale = jnp.ones((out_planes,), jnp.float32)
            self.shift = jnp.zeros((out_planes,), jnp.float32)
        if b is not None:
            self.shift = self.shift + self.scale * b

    def __call__(self, x_nchw):
        # NOTE(perf): in an NHWC end-to-end model these two layout transposes
        # would be dropped; they are kept here only for PyTorch NCHW parity.
        x = jnp.transpose(x_nchw, (0, 2, 3, 1)).astype(jnp.float32)   # NCHW -> NHWC
        y = fused_conv_bn_relu(x, self.weight, self.scale, self.shift,
                               stride=self.stride, padding=self.padding,
                               dilation=self.dilation, relu=self.relu,
                               out_dtype=jnp.float32)
        return jnp.transpose(y, (0, 3, 1, 2))                         # NHWC -> NCHW


if __name__ == "__main__":
    key = jax.random.PRNGKey(0)
    in_planes, out_planes = 4, 128     # Cout=128 keeps output stores lane-dense
    conv = BasicConv(jax.random.fold_in(key, 0), in_planes, out_planes,
                     kernel_size=3, stride=1, padding=1, dilation=1,
                     relu=True, bn=True, bias=False)
    x = jax.random.normal(jax.random.fold_in(key, 1),
                          (2, in_planes, 16, 16), jnp.float32)

    fwd = jax.jit(lambda xx: conv(xx))
    out = fwd(x)
    jax.block_until_ready(out)
    assert out.shape == (2, out_planes, 16, 16)
    assert bool(jnp.all(jnp.isfinite(out)))
    assert bool(jnp.all(out >= 0))     # ReLU epilogue

    # Pure-JAX reference with the same folded/bf16-quantized operands, f32 math.
    def ref_forward(xx):
        xb = jnp.transpose(xx, (0, 2, 3, 1)).astype(jnp.bfloat16).astype(jnp.float32)
        w_folded = conv.weight * conv.scale[None, None, None, :]
        wb = w_folded.astype(jnp.bfloat16).astype(jnp.float32)
        y = jax.lax.conv_general_dilated(
            xb, wb,
            window_strides=(conv.stride, conv.stride),
            padding=((conv.padding, conv.padding), (conv.padding, conv.padding)),
            rhs_dilation=(conv.dilation, conv.dilation),
            dimension_numbers=("NHWC", "HWIO", "NHWC"),
            precision=jax.lax.Precision.HIGHEST)
        y = y + conv.shift[None, None, None, :]
        if conv.relu:
            y = jnp.maximum(y, 0.0)
        return jnp.transpose(y, (0, 3, 1, 2))

    ref = ref_forward(x)
    max_err = float(jnp.max(jnp.abs(out - ref)))
    assert bool(jnp.allclose(out, ref, atol=2e-3, rtol=2e-3)), max_err

    print("KERNEL_OK")
</pallas_src>

<mosaic_0001>
module attributes {stable_mosaic.version = 11 : i64} {
  func.func @_conv_bn_relu_kernel(%arg0: i32, %arg1: i32, %arg2: memref<1x18x18x4xbf16, #tpu.memory_space<vmem>>, %arg3: memref<128x128xbf16, #tpu.memory_space<vmem>>, %arg4: memref<1x128xf32, #tpu.memory_space<vmem>>, %arg5: memref<256x128xf32, #tpu.memory_space<vmem>>) attributes {dimension_semantics = [#tpu.dimension_semantics<parallel>, #tpu.dimension_semantics<parallel>], iteration_bounds = array<i64: 2, 1>, scalar_prefetch = 0 : i64, scratch_operands = 0 : i64, tpu.core_type = #tpu.core_type<tc>, window_params = [{transform_indices = @transform_0, window_bounds = array<i64: 1, 18, 18, 4>}, {pipeline_mode = #tpu.pipeline_mode<synchronous>, transform_indices = @transform_1, window_bounds = array<i64: 128, 128>}, {pipeline_mode = #tpu.pipeline_mode<synchronous>, transform_indices = @transform_2, window_bounds = array<i64: 1, 128>}, {transform_indices = @transform_3, window_bounds = array<i64: 256, 128>}]} {
    %c16_i32 = arith.constant 16 : i32
    %0 = arith.muli %arg1, %c16_i32 : i32
    %1 = tpu.assume_multiple %0, 16 : i32
    %c0_i32 = arith.constant 0 : i32
    %2 = arith.addi %1, %c0_i32 : i32
    %c0 = arith.constant 0 : index
    %3 = arith.index_cast %2 : i32 to index
    %c0_0 = arith.constant 0 : index
    %c0_1 = arith.constant 0 : index
    %4 = vector.load %arg2[%c0, %3, %c0_0, %c0_1] : memref<1x18x18x4xbf16, #tpu.memory_space<vmem>>, vector<1x16x16x4xbf16>
    %5 = vector.shape_cast %4 : vector<1x16x16x4xbf16> to vector<16x16x4xbf16>
    %c0_i32_2 = arith.constant 0 : i32
    %6 = arith.addi %1, %c0_i32_2 : i32
    %c0_3 = arith.constant 0 : index
    %7 = arith.index_cast %6 : i32 to index
    %c1 = arith.constant 1 : index
    %c0_4 = arith.constant 0 : index
    %8 = vector.load %arg2[%c0_3, %7, %c1, %c0_4] : memref<1x18x18x4xbf16, #tpu.memory_space<vmem>>, vector<1x16x16x4xbf16>
    %9 = vector.shape_cast %8 : vector<1x16x16x4xbf16> to vector<16x16x4xbf16>
    %c0_i32_5 = arith.constant 0 : i32
    %10 = arith.addi %1, %c0_i32_5 : i32
    %c0_6 = arith.constant 0 : index
    %11 = arith.index_cast %10 : i32 to index
    %c2 = arith.constant 2 : index
    %c0_7 = arith.constant 0 : index
    %12 = vector.load %arg2[%c0_6, %11, %c2, %c0_7] : memref<1x18x18x4xbf16, #tpu.memory_space<vmem>>, vector<1x16x16x4xbf16>
    %13 = vector.shape_cast %12 : vector<1x16x16x4xbf16> to vector<16x16x4xbf16>
    %c1_i32 = arith.constant 1 : i32
    %14 = arith.addi %1, %c1_i32 : i32
    %c0_8 = arith.constant 0 : index
    %15 = arith.index_cast %14 : i32 to index
    %c0_9 = arith.constant 0 : index
    %c0_10 = arith.constant 0 : index
    %16 = vector.load %arg2[%c0_8, %15, %c0_9, %c0_10] : memref<1x18x18x4xbf16, #tpu.memory_space<vmem>>, vector<1x16x16x4xbf16>
    %17 = vector.shape_cast %16 : vector<1x16x16x4xbf16> to vector<16x16x4xbf16>
    %c1_i32_11 = arith.constant 1 : i32
    %18 = arith.addi %1, %c1_i32_11 : i32
    %c0_12 = arith.constant 0 : index
    %19 = arith.index_cast %18 : i32 to index
    %c1_13 = arith.constant 1 : index
    %c0_14 = arith.constant 0 : index
    %20 = vector.load %arg2[%c0_12, %19, %c1_13, %c0_14] : memref<1x18x18x4xbf16, #tpu.memory_space<vmem>>, vector<1x16x16x4xbf16>
    %21 = vector.shape_cast %20 : vector<1x16x16x4xbf16> to vector<16x16x4xbf16>
    %c1_i32_15 = arith.constant 1 : i32
    %22 = arith.addi %1, %c1_i32_15 : i32
    %c0_16 = arith.constant 0 : index
    %23 = arith.index_cast %22 : i32 to index
    %c2_17 = arith.constant 2 : index
    %c0_18 = arith.constant 0 : index
    %24 = vector.load %arg2[%c0_16, %23, %c2_17, %c0_18] : memref<1x18x18x4xbf16, #tpu.memory_space<vmem>>, vector<1x16x16x4xbf16>
    %25 = vector.shape_cast %24 : vector<1x16x16x4xbf16> to vector<16x16x4xbf16>
    %c2_i32 = arith.constant 2 : i32
    %26 = arith.addi %1, %c2_i32 : i32
    %c0_19 = arith.constant 0 : index
    %27 = arith.index_cast %26 : i32 to index
    %c0_20 = arith.constant 0 : index
    %c0_21 = arith.constant 0 : index
    %28 = vector.load %arg2[%c0_19, %27, %c0_20, %c0_21] : memref<1x18x18x4xbf16, #tpu.memory_space<vmem>>, vector<1x16x16x4xbf16>
    %29 = vector.shape_cast %28 : vector<1x16x16x4xbf16> to vector<16x16x4xbf16>
    %c2_i32_22 = arith.constant 2 : i32
    %30 = arith.addi %1, %c2_i32_22 : i32
    %c0_23 = arith.constant 0 : index
    %31 = arith.index_cast %30 : i32 to index
    %c1_24 = arith.constant 1 : index
    %c0_25 = arith.constant 0 : index
    %32 = vector.load %arg2[%c0_23, %31, %c1_24, %c0_25] : memref<1x18x18x4xbf16, #tpu.memory_space<vmem>>, vector<1x16x16x4xbf16>
    %33 = vector.shape_cast %32 : vector<1x16x16x4xbf16> to vector<16x16x4xbf16>
    %c2_i32_26 = arith.constant 2 : i32
    %34 = arith.addi %1, %c2_i32_26 : i32
    %c0_27 = arith.constant 0 : index
    %35 = arith.index_cast %34 : i32 to index
    %c2_28 = arith.constant 2 : index
    %c0_29 = arith.constant 0 : index
    %36 = vector.load %arg2[%c0_27, %35, %c2_28, %c0_29] : memref<1x18x18x4xbf16, #tpu.memory_space<vmem>>, vector<1x16x16x4xbf16>
    %37 = vector.shape_cast %36 : vector<1x16x16x4xbf16> to vector<16x16x4xbf16>
    %cst = arith.constant 0.000000e+00 : bf16
    %38 = vector.broadcast %cst : bf16 to vector<16x16x92xbf16>
    %39 = tpu.concatenate %5, %9, %13, %17, %21, %25, %29, %33, %37, %38 in 2 : vector<16x16x4xbf16>, vector<16x16x4xbf16>, vector<16x16x4xbf16>, vector<16x16x4xbf16>, vector<16x16x4xbf16>, vector<16x16x4xbf16>, vector<16x16x4xbf16>, vector<16x16x4xbf16>, vector<16x16x4xbf16>, vector<16x16x92xbf16> -> vector<16x16x128xbf16>
    %40 = vector.shape_cast %39 : vector<16x16x128xbf16> to vector<256x128xbf16>
    %c0_30 = arith.constant 0 : index
    %c0_31 = arith.constant 0 : index
    %41 = vector.load %arg3[%c0_30, %c0_31] : memref<128x128xbf16, #tpu.memory_space<vmem>>, vector<128x128xbf16>
    %cst_32 = arith.constant dense<0.000000e+00> : vector<256x128xf32>
    %42 = tpu.matmul %40, %41, %cst_32 {dimension_numbers = #tpu.dot_dimension_numbers<[1], [0], [0], [1], [0, 0, 1, 1], [], []>} : vector<256x128xbf16>, vector<128x128xbf16>, vector<256x128xf32> -> vector<256x128xf32>
    %c0_33 = arith.constant 0 : index
    %c0_34 = arith.constant 0 : index
    %43 = vector.load %arg4[%c0_33, %c0_34] : memref<1x128xf32, #tpu.memory_space<vmem>>, vector<1x128xf32>
    %44 = vector.broadcast %43 : vector<1x128xf32> to vector<256x128xf32>
    %45 = arith.addf %42, %44 : vector<256x128xf32>
    %cst_35 = arith.constant 0.000000e+00 : f32
    %46 = vector.broadcast %cst_35 : f32 to vector<256x128xf32>
    %47 = arith.maximumf %45, %46 : vector<256x128xf32>
    %c0_36 = arith.constant 0 : index
    %c0_37 = arith.constant 0 : index
    %48 = vector.load %arg5[%c0_36, %c0_37] : memref<256x128xf32, #tpu.memory_space<vmem>>, vector<256x128xf32>
    tpu.vector_store %arg5[%c0_36, %c0_37], %47 {strides = array<i32>} : memref<256x128xf32, #tpu.memory_space<vmem>>, vector<256x128xf32>,
    return
  }
  func.func @transform_0(%arg0: i32, %arg1: i32) -> (i32, i32, i32, i32) {
    %c0_i32 = arith.constant 0 : i32
    %c0_i32_0 = arith.constant 0 : i32
    %c0_i32_1 = arith.constant 0 : i32
    %c0_i32_2 = arith.constant 0 : i32
    return %arg0, %c0_i32, %c0_i32_0, %c0_i32_1 : i32, i32, i32, i32
  }
  func.func @transform_1(%arg0: i32, %arg1: i32) -> (i32, i32) {
    %c0_i32 = arith.constant 0 : i32
    %c0_i32_0 = arith.constant 0 : i32
    %c0_i32_1 = arith.constant 0 : i32
    return %c0_i32, %c0_i32_0 : i32, i32
  }
  func.func @transform_2(%arg0: i32, %arg1: i32) -> (i32, i32) {
    %c0_i32 = arith.constant 0 : i32
    %c0_i32_0 = arith.constant 0 : i32
    %c0_i32_1 = arith.constant 0 : i32
    return %c0_i32, %c0_i32_0 : i32, i32
  }
  func.func @transform_3(%arg0: i32, %arg1: i32) -> (i32, i32) {
    %c1_i32 = arith.constant 1 : i32
    %0 = arith.muli %arg0, %c1_i32 : i32
    %1 = arith.addi %0, %arg1 : i32
    %c0_i32 = arith.constant 0 : i32
    %c0_i32_0 = arith.constant 0 : i32
    return %1, %c0_i32 : i32, i32
  }
}

</mosaic_0001>

<llo_original>
// kernel: _lambda_.1
$region0: #{_lambda_.1}
  #allocation0 [shape = 'u32[]', space=smem, size = 0x4, offset = 0x4, fixed_abs, tag = 'smem constant byte address 0x4 - core index']
  #allocation1 [shape = 'u32[144,128]{1,0:T(1,128)}', space=vmem, size = 0x12000, scoped, tag = 'internal scratch']
  %s0 = inlined_call_operand.vmem [shape: bf16[2,18,18,4], index: 0, kind: input, shape index: {}]
  %s1 = inlined_call_operand.vmem [shape: bf16[128,128], index: 1, kind: input, shape index: {}]
  %s2 = inlined_call_operand.vmem [shape: f32[1,128], index: 2, kind: input, shape index: {}]
  %s3 = inlined_call_operand.hbm [shape: f32[512,128], index: 3, kind: output, shape index: {}]
  %s4 = sld [smem:[#allocation0]]
  $region45: #{_lambda_.1} parent=0
    _
  %s6 = ssub.s32 1, %s4
  %s7 = scalar_select 0, %s6, %s4
  $region1: #{_lambda_.1} parent=0
    #allocation2 [shape = 'u8[262144]{0}', space=vmem, size = 0x40000, scoped, tag = 'output window, operand 0']
    #allocation3 [shape = 's32[2]{0}', space=sflag, size = 0x8, scoped, tag = 'scoped memory for _lambda_.1']
    %8 = vsyncpa [#allocation3], 0
    %s9 = scalar_lea.sflag [#allocation3], 1
    %10 = vsyncpa %s9, 0
    loop: start=0, step=1, limit=4
    $region2: #{_lambda_.1} parent=1 // loop_pre_header
      _
    $region3: #{_lambda_.1} parent=1 // loop_header
      %s12 = sphi 0, %s16
      %p13 = scmp.ge.s32.totalorder %s12, 4
      %s19 = sphi 0, %s31
      %s20 = sphi 0, %s27
      %s21 = sphi 0, %s19
      %s22 = sphi 0, %s20
      %s23 = sphi 0, %s21
      %s24 = sphi 0, %s22
      %s34 = sphi 0, %s36
      %s37 = sphi 0, %s34
      %s38 = sphi 0, %s37
      %s54 = sphi 0, %s38
      %s58 = sphi 0, %s58
      %s60 = sphi 0, %s58
      %s61 = sphi 0, %s60
      %s75 = sphi 0, %s61
      %s79 = sphi 0, %s79
      %s81 = sphi 0, %s79
      %s82 = sphi 0, %s81
      %s96 = sphi 0, %s82
      %s104 = sphi 0, %s106
      %s107 = sphi 0, %s104
      %s108 = sphi 0, %s107
      %s124 = sphi 0, %s108
    $region4: #{_lambda_.1} parent=1 // loop_header_branch
      %15 = sbr.rel (%p13) target = $region8
    $region5: #{_lambda_.1} parent=1 // loop_body
      %s17 = ssub.s32 %s12, 1
      %s18 = ssub.s32 %s12, 2
      %s25 = sadd.s32 1, %s20
      %p26 = scmp.ge.s32.totalorder %s25, 1
      %s27 = scalar_select %p26, 0, %s25
      %s28 = sadd.s32 1, %s19
      %s29 = scalar_select %p26, %s28, %s19
      %p30 = scmp.ge.s32.totalorder %s29, 2
      %s31 = scalar_select %p30, 0, %s29
      %s32 = ssub.s32 %s19, %s31
      %p33 = scmp.eq.s32.totalorder %s32, 0
      %s35 = sadd.s32 %s34, 1
      %s36 = scalar_select %p33, %s34, %s35
      %p39 = pneg %p33
      %p40 = scmp.eq.s32.totalorder %s12, 1
      %p41 = por %p39, %p40
      %p42 = scmp.ne.s32.totalorder %s34, %s37
      %p43 = scmp.eq.s32.totalorder %s12, 0
      %p44 = por %p42, %p43
      %p45 = scmp.ne.s32.totalorder %s34, %s37
      %p46 = scmp.eq.s32.totalorder %s17, 1
      %p47 = por %p45, %p46
      %p48 = scmp.ne.s32.totalorder %s37, %s38
      %p49 = scmp.eq.s32.totalorder %s17, 0
      %p50 = por %p48, %p49
      %p51 = scmp.ne.s32.totalorder %s37, %s38
      %p52 = scmp.eq.s32.totalorder %s18, 1
      %p53 = por %p51, %p52
      %p55 = scmp.ne.s32.totalorder %s38, %s54
      %p56 = scmp.eq.s32.totalorder %s18, 0
      %p57 = por %p55, %p56
      %s59 = sadd.s32 %s58, 1
      %p62 = scmp.eq.s32.totalorder %s12, 1
      %p63 = scmp.ne.s32.totalorder %s58, %s60
      %p64 = scmp.eq.s32.totalorder %s12, 0
      %p65 = por %p63, %p64
      %p66 = scmp.ne.s32.totalorder %s58, %s60
      %p67 = scmp.eq.s32.totalorder %s17, 1
      %p68 = por %p66, %p67
      %p69 = scmp.ne.s32.totalorder %s60, %s61
      %p70 = scmp.eq.s32.totalorder %s17, 0
      %p71 = por %p69, %p70
      %p72 = scmp.ne.s32.totalorder %s60, %s61
      %p73 = scmp.eq.s32.totalorder %s18, 1
      %p74 = por %p72, %p73
      %p76 = scmp.ne.s32.totalorder %s61, %s75
      %p77 = scmp.eq.s32.totalorder %s18, 0
      %p78 = por %p76, %p77
      %s80 = sadd.s32 %s79, 1
      %p83 = scmp.eq.s32.totalorder %s12, 1
      %p84 = scmp.ne.s32.totalorder %s79, %s81
      %p85 = scmp.eq.s32.totalorder %s12, 0
      %p86 = por %p84, %p85
      %p87 = scmp.ne.s32.totalorder %s79, %s81
      %p88 = scmp.eq.s32.totalorder %s17, 1
      %p89 = por %p87, %p88
      %p90 = scmp.ne.s32.totalorder %s81, %s82
      %p91 = scmp.eq.s32.totalorder %s17, 0
      %p92 = por %p90, %p91
      %p93 = scmp.ne.s32.totalorder %s81, %s82
      %p94 = scmp.eq.s32.totalorder %s18, 1
      %p95 = por %p93, %p94
      %p97 = scmp.ne.s32.totalorder %s82, %s96
      %p98 = scmp.eq.s32.totalorder %s18, 0
      %p99 = por %p97, %p98
      %s100 = sadd.s32 %s19, %s20
      %s101 = sadd.s32 %s31, %s27
      %s102 = ssub.s32 %s100, %s101
      %p103 = scmp.eq.s32.totalorder %s102, 0
      %s105 = sadd.s32 %s104, 1
      %s106 = scalar_select %p103, %s104, %s105
      %p109 = pneg %p103
      %p110 = scmp.eq.s32.totalorder %s12, 1
      %p111 = por %p109, %p110
      %p112 = scmp.ne.s32.totalorder %s104, %s107
      %p113 = scmp.eq.s32.totalorder %s12, 0
      %p114 = por %p112, %p113
      %p115 = scmp.ne.s32.totalorder %s104, %s107
      %p116 = scmp.eq.s32.totalorder %s17, 1
      %p117 = por %p115, %p116
      %p118 = scmp.ne.s32.totalorder %s107, %s108
      %p119 = scmp.eq.s32.totalorder %s17, 0
      %p120 = por %p118, %p119
      %p121 = scmp.ne.s32.totalorder %s107, %s108
      %p122 = scmp.eq.s32.totalorder %s18, 1
      %p123 = por %p121, %p122
      %p125 = scmp.ne.s32.totalorder %s108, %s124
      %p126 = scmp.eq.s32.totalorder %s18, 0
      %p127 = por %p125, %p126
      %p128 = scmp.le.s32.totalorder 1, %s12
      %p129 = scmp.lt.s32.totalorder %s12, 3
      %p130 = pnand %p128, %p129
      %p131 = pneg %p130
      // Predicated region
      $region9: #{_lambda_.1} parent=5 // pred_check
        _
      $region10: #{_lambda_.1} parent=5 // pred_check_branch
        %133 = sbr.rel (%p130) target = $region12
      $region11: #{_lambda_.1} parent=5 // pred_region
        %s134 = ssub.s32 %s12, 1
        // Predicated region
        $region13: #{_lambda_.1} parent=11 // pred_check
          %p135 = pneg %p71
        $region14: #{_lambda_.1} parent=11 // pred_check_branch
          %137 = sbr.rel (%p135) target = $region16
        $region15: #{_lambda_.1} parent=11 // pred_region
          _
        $region16: #{_lambda_.1} parent=11 // pred_fallthru
          _
        // Predicated region
        $region17: #{_lambda_.1} parent=11 // pred_check
          %p138 = pneg %p92
        $region18: #{_lambda_.1} parent=11 // pred_check_branch
          %140 = sbr.rel (%p138) target = $region20
        $region19: #{_lambda_.1} parent=11 // pred_region
          _
        $region20: #{_lambda_.1} parent=11 // pred_fallthru
          _
      $region12: #{_lambda_.1} parent=5 // pred_fallthru
        _
      %p141 = scmp.lt.s32.totalorder %s12, 2
      // Predicated region
      $region21: #{_lambda_.1} parent=5 // pred_check
        %p142 = pneg %p141
      $region22: #{_lambda_.1} parent=5 // pred_check_branch
        %144 = sbr.rel (%p142) target = $region24
      $region23: #{_lambda_.1} parent=5 // pred_region
        // Predicated region
        $region25: #{_lambda_.1} parent=23 // pred_check
          %p145 = pneg %p44
        $region26: #{_lambda_.1} parent=23 // pred_check_branch
          %147 = sbr.rel (%p145) target = $region28
        $region27: #{_lambda_.1} parent=23 // pred_region
          %p148 = scmp.lt.s32.totalorder %s19, 1
          %s149 = scalar_select %p148, %s19, 1
          %s150 = smul.addr %s149, 54
          %s151 = smul.addr %s150, 4
          %s152 = scalar_lea.vmem %s0, %s151
        $region28: #{_lambda_.1} parent=23 // pred_fallthru
          _
      $region24: #{_lambda_.1} parent=5 // pred_fallthru
        _
      %p153 = scmp.le.s32.totalorder 1, %s12
      %p154 = scmp.lt.s32.totalorder %s12, 3
      %p155 = pnand %p153, %p154
      %p156 = pneg %p155
      // Predicated region
      $region29: #{_lambda_.1} parent=5 // pred_check
        _
      $region30: #{_lambda_.1} parent=5 // pred_check_branch
        %158 = sbr.rel (%p155) target = $region32
      $region31: #{_lambda_.1} parent=5 // pred_region
        %s159 = ssub.s32 %s12, 1
        %p160 = scmp.lt.s32.totalorder %s21, 1
        %s161 = scalar_select %p160, %s21, 1
        %s162 = smul.addr %s161, 54
        %s163 = smul.addr %s162, 4
        %s164 = scalar_lea.vmem %s0, %s163
        %p165 = pneg %p50
        %p166 = pneg %p47
        %p167 = pneg %p71
        %p168 = pneg %p68
        %p169 = pneg %p92
        %p170 = pneg %p89
        %p171 = pneg %p120
        %p172 = pneg %p117
        %s173 = sand.u32 %s107, 1
        %s174 = scalar_lea.sflag [#allocation3], %s173
        %s175 = sand.u32 %s107, 1
        %s176 = smul.addr %s175, 256
        %s177 = scalar_lea.vmem [#allocation2], %s176
        %p178 = scmp.lt.s32.totalorder %s21, 1
        %s179 = scalar_select %p178, %s21, 1
        %s180 = smul.addr %s179, 54
        %s181 = smul.addr %s180, 4
        %s182 = scalar_lea.vmem %s0, %s181
        %s183 = sadd.s32 %s21, %s22
        %s184 = smul.u32 32, %s183
        %s186 = smul.u32 %s22, 16
        %s187 = smul.u32 %s186, 3
        %s188 = smul.addr %s187, 4
        %s189 = scalar_lea.vmem %s182, %s188
        %v190 = vld [vmem:[%s189] sm:$0xf]
        %v191 = vld [vmem:[%s189 + $0x4] sm:$0xf]
        %v192 = vld [vmem:[%s189 + $0xc] sm:$0xf]
        %v193 = vld [vmem:[%s189 + $0x10] sm:$0xf]
        %v194 = vld [vmem:[%s189 + $0x18] sm:$0xf]
        %v195 = vld [vmem:[%s189 + $0x1c] sm:$0xf]
        %v196 = vld [vmem:[%s189 + $0x24] sm:$0xf]
        %v197 = vld [vmem:[%s189 + $0x28] sm:$0xf]
        %v198 = vld [vmem:[%s189 + $0x30] sm:$0xf]
        %v199 = vld [vmem:[%s189 + $0x34] sm:$0xf]
        %v200 = vld [vmem:[%s189 + $0x3c] sm:$0xf]
        %v201 = vld [vmem:[%s189 + $0x40] sm:$0xf]
        %v202 = vld [vmem:[%s189 + $0x48] sm:$0xf]
        %v203 = vld [vmem:[%s189 + $0x4c] sm:$0xf]
        %v204 = vld [vmem:[%s189 + $0x54] sm:$0xf]
        %v205 = vld [vmem:[%s189 + $0x58] sm:$0xf]
        %v206 = vld [vmem:[%s189 + $0x60] sm:$0xf]
        %v207 = vld [vmem:[%s189 + $0x64] sm:$0xf]
        %v208 = vld [vmem:[%s189 + $0x6c] sm:$0xf]
        %v209 = vld [vmem:[%s189 + $0x70] sm:$0xf]
        %v210 = vld [vmem:[%s189 + $0x78] sm:$0xf]
        %v211 = vld [vmem:[%s189 + $0x7c] sm:$0xf]
        %v212 = vld [vmem:[%s189 + $0x84] sm:$0xf]
        %v213 = vld [vmem:[%s189 + $0x88] sm:$0xf]
        %v214 = vld [vmem:[%s189 + $0x90] sm:$0xf]
        %v215 = vld [vmem:[%s189 + $0x94] sm:$0xf]
        %v216 = vld [vmem:[%s189 + $0x9c] sm:$0xf]
        %v217 = vld [vmem:[%s189 + $0xa0] sm:$0xf]
        %v218 = vld [vmem:[%s189 + $0xa8] sm:$0xf]
        %v219 = vld [vmem:[%s189 + $0xac] sm:$0xf]
        %v220 = vld [vmem:[%s189 + $0xb4] sm:$0xf]
        %v221 = vld [vmem:[%s189 + $0xb8] sm:$0xf]
        %v222 = vld [vmem:[%s189 + $0x8] sm:$0x1]
        %v223 = vld [vmem:[%s189 + $0x14] sm:$0x1]
        %v224 = vld [vmem:[%s189 + $0x20] sm:$0x1]
        %v225 = vld [vmem:[%s189 + $0x2c] sm:$0x1]
        %v226 = vld [vmem:[%s189 + $0x38] sm:$0x1]
        %v227 = vld [vmem:[%s189 + $0x44] sm:$0x1]
        %v228 = vld [vmem:[%s189 + $0x50] sm:$0x1]
        %v229 = vld [vmem:[%s189 + $0x5c] sm:$0x1]
        %v230 = vld [vmem:[%s189 + $0x68] sm:$0x1]
        %v231 = vld [vmem:[%s189 + $0x74] sm:$0x1]
        %v232 = vld [vmem:[%s189 + $0x80] sm:$0x1]
        %v233 = vld [vmem:[%s189 + $0x8c] sm:$0x1]
        %v234 = vld [vmem:[%s189 + $0x98] sm:$0x1]
        %v235 = vld [vmem:[%s189 + $0xa4] sm:$0x1]
        %v236 = vld [vmem:[%s189 + $0xb0] sm:$0x1]
        %v237 = vld [vmem:[%s189 + $0xbc] sm:$0x1]
        %v238 = vld [vmem:[%s189] sm:$0xe]
        %v239 = vld [vmem:[%s189 + $0xc] sm:$0xe]
        %v240 = vld [vmem:[%s189 + $0x18] sm:$0xe]
        %v241 = vld [vmem:[%s189 + $0x24] sm:$0xe]
        %v242 = vld [vmem:[%s189 + $0x30] sm:$0xe]
        %v243 = vld [vmem:[%s189 + $0x3c] sm:$0xe]
        %v244 = vld [vmem:[%s189 + $0x48] sm:$0xe]
        %v245 = vld [vmem:[%s189 + $0x54] sm:$0xe]
        %v246 = vld [vmem:[%s189 + $0x60] sm:$0xe]
        %v247 = vld [vmem:[%s189 + $0x6c] sm:$0xe]
        %v248 = vld [vmem:[%s189 + $0x78] sm:$0xe]
        %v249 = vld [vmem:[%s189 + $0x84] sm:$0xe]
        %v250 = vld [vmem:[%s189 + $0x90] sm:$0xe]
        %v251 = vld [vmem:[%s189 + $0x9c] sm:$0xe]
        %v252 = vld [vmem:[%s189 + $0xa8] sm:$0xe]
        %v253 = vld [vmem:[%s189 + $0xb4] sm:$0xe]
        %s254 = sadd.s32 %s186, 1
        %s255 = smul.u32 %s254, 3
        %s256 = smul.addr %s255, 4
        %s257 = scalar_lea.vmem %s182, %s256
        %v258 = vld [vmem:[%s257] sm:$0xf]
        %v259 = vld [vmem:[%s257 + $0x4] sm:$0xf]
        %v260 = vld [vmem:[%s257 + $0xc] sm:$0xf]
        %v261 = vld [vmem:[%s257 + $0x10] sm:$0xf]
        %v262 = vld [vmem:[%s257 + $0x18] sm:$0xf]
        %v263 = vld [vmem:[%s257 + $0x1c] sm:$0xf]
        %v264 = vld [vmem:[%s257 + $0x24] sm:$0xf]
        %v265 = vld [vmem:[%s257 + $0x28] sm:$0xf]
        %v266 = vld [vmem:[%s257 + $0x30] sm:$0xf]
        %v267 = vld [vmem:[%s257 + $0x34] sm:$0xf]
        %v268 = vld [vmem:[%s257 + $0x3c] sm:$0xf]
        %v269 = vld [vmem:[%s257 + $0x40] sm:$0xf]
        %v270 = vld [vmem:[%s257 + $0x48] sm:$0xf]
        %v271 = vld [vmem:[%s257 + $0x4c] sm:$0xf]
        %v272 = vld [vmem:[%s257 + $0x54] sm:$0xf]
        %v273 = vld [vmem:[%s257 + $0x58] sm:$0xf]
        %v274 = vld [vmem:[%s257 + $0x60] sm:$0xf]
        %v275 = vld [vmem:[%s257 + $0x64] sm:$0xf]
        %v276 = vld [vmem:[%s257 + $0x6c] sm:$0xf]
        %v277 = vld [vmem:[%s257 + $0x70] sm:$0xf]
        %v278 = vld [vmem:[%s257 + $0x78] sm:$0xf]
        %v279 = vld [vmem:[%s257 + $0x7c] sm:$0xf]
        %v280 = vld [vmem:[%s257 + $0x84] sm:$0xf]
        %v281 = vld [vmem:[%s257 + $0x88] sm:$0xf]
        %v282 = vld [vmem:[%s257 + $0x90] sm:$0xf]
        %v283 = vld [vmem:[%s257 + $0x94] sm:$0xf]
        %v284 = vld [vmem:[%s257 + $0x9c] sm:$0xf]
        %v285 = vld [vmem:[%s257 + $0xa0] sm:$0xf]
        %v286 = vld [vmem:[%s257 + $0xa8] sm:$0xf]
        %v287 = vld [vmem:[%s257 + $0xac] sm:$0xf]
        %v288 = vld [vmem:[%s257 + $0xb4] sm:$0xf]
        %v289 = vld [vmem:[%s257 + $0xb8] sm:$0xf]
        %v290 = vld [vmem:[%s257 + $0x8] sm:$0x1]
        %v291 = vld [vmem:[%s257 + $0x14] sm:$0x1]
        %v292 = vld [vmem:[%s257 + $0x20] sm:$0x1]
        %v293 = vld [vmem:[%s257 + $0x2c] sm:$0x1]
        %v294 = vld [vmem:[%s257 + $0x38] sm:$0x1]
        %v295 = vld [vmem:[%s257 + $0x44] sm:$0x1]
        %v296 = vld [vmem:[%s257 + $0x50] sm:$0x1]
        %v297 = vld [vmem:[%s257 + $0x5c] sm:$0x1]
        %v298 = vld [vmem:[%s257 + $0x68] sm:$0x1]
        %v299 = vld [vmem:[%s257 + $0x74] sm:$0x1]
        %v300 = vld [vmem:[%s257 + $0x80] sm:$0x1]
        %v301 = vld [vmem:[%s257 + $0x8c] sm:$0x1]
        %v302 = vld [vmem:[%s257 + $0x98] sm:$0x1]
        %v303 = vld [vmem:[%s257 + $0xa4] sm:$0x1]
        %v304 = vld [vmem:[%s257 + $0xb0] sm:$0x1]
        %v305 = vld [vmem:[%s257 + $0xbc] sm:$0x1]
        %v306 = vld [vmem:[%s257] sm:$0xe]
        %v307 = vld [vmem:[%s257 + $0xc] sm:$0xe]
        %v308 = vld [vmem:[%s257 + $0x18] sm:$0xe]
        %v309 = vld [vmem:[%s257 + $0x24] sm:$0xe]
        %v310 = vld [vmem:[%s257 + $0x30] sm:$0xe]
        %v311 = vld [vmem:[%s257 + $0x3c] sm:$0xe]
        %v312 = vld [vmem:[%s257 + $0x48] sm:$0xe]
        %v313 = vld [vmem:[%s257 + $0x54] sm:$0xe]
        %v314 = vld [vmem:[%s257 + $0x60] sm:$0xe]
        %v315 = vld [vmem:[%s257 + $0x6c] sm:$0xe]
        %v316 = vld [vmem:[%s257 + $0x78] sm:$0xe]
        %v317 = vld [vmem:[%s257 + $0x84] sm:$0xe]
        %v318 = vld [vmem:[%s257 + $0x90] sm:$0xe]
        %v319 = vld [vmem:[%s257 + $0x9c] sm:$0xe]
        %v320 = vld [vmem:[%s257 + $0xa8] sm:$0xe]
        %v321 = vld [vmem:[%s257 + $0xb4] sm:$0xe]
        %s322 = sadd.s32 %s186, 2
        %s323 = smul.u32 %s322, 3
        %s324 = smul.addr %s323, 4
        %s325 = scalar_lea.vmem %s182, %s324
        %v326 = vld [vmem:[%s325] sm:$0xf]
        %v327 = vld [vmem:[%s325 + $0x4] sm:$0xf]
        %v328 = vld [vmem:[%s325 + $0xc] sm:$0xf]
        %v329 = vld [vmem:[%s325 + $0x10] sm:$0xf]
        %v330 = vld [vmem:[%s325 + $0x18] sm:$0xf]
        %v331 = vld [vmem:[%s325 + $0x1c] sm:$0xf]
        %v332 = vld [vmem:[%s325 + $0x24] sm:$0xf]
        %v333 = vld [vmem:[%s325 + $0x28] sm:$0xf]
        %v334 = vld [vmem:[%s325 + $0x30] sm:$0xf]
        %v335 = vld [vmem:[%s325 + $0x34] sm:$0xf]
        %v336 = vld [vmem:[%s325 + $0x3c] sm:$0xf]
        %v337 = vld [vmem:[%s325 + $0x40] sm:$0xf]
        %v338 = vld [vmem:[%s325 + $0x48] sm:$0xf]
        %v339 = vld [vmem:[%s325 + $0x4c] sm:$0xf]
        %v340 = vld [vmem:[%s325 + $0x54] sm:$0xf]
        %v341 = vld [vmem:[%s325 + $0x58] sm:$0xf]
        %v342 = vld [vmem:[%s325 + $0x60] sm:$0xf]
        %v343 = vld [vmem:[%s325 + $0x64] sm:$0xf]
        %v344 = vld [vmem:[%s325 + $0x6c] sm:$0xf]
        %v345 = vld [vmem:[%s325 + $0x70] sm:$0xf]
        %v346 = vld [vmem:[%s325 + $0x78] sm:$0xf]
        %v347 = vld [vmem:[%s325 + $0x7c] sm:$0xf]
        %v348 = vld [vmem:[%s325 + $0x84] sm:$0xf]
        %v349 = vld [vmem:[%s325 + $0x88] sm:$0xf]
        %v350 = vld [vmem:[%s325 + $0x90] sm:$0xf]
        %v351 = vld [vmem:[%s325 + $0x94] sm:$0xf]
        %v352 = vld [vmem:[%s325 + $0x9c] sm:$0xf]
        %v353 = vld [vmem:[%s325 + $0xa0] sm:$0xf]
        %v354 = vld [vmem:[%s325 + $0xa8] sm:$0xf]
        %v355 = vld [vmem:[%s325 + $0xac] sm:$0xf]
        %v356 = vld [vmem:[%s325 + $0xb4] sm:$0xf]
        %v357 = vld [vmem:[%s325 + $0xb8] sm:$0xf]
        %v358 = vld [vmem:[%s325 + $0x8] sm:$0x1]
        %v359 = vld [vmem:[%s325 + $0x14] sm:$0x1]
        %v360 = vld [vmem:[%s325 + $0x20] sm:$0x1]
        %v361 = vld [vmem:[%s325 + $0x2c] sm:$0x1]
        %v362 = vld [vmem:[%s325 + $0x38] sm:$0x1]
        %v363 = vld [vmem:[%s325 + $0x44] sm:$0x1]
        %v364 = vld [vmem:[%s325 + $0x50] sm:$0x1]
        %v365 = vld [vmem:[%s325 + $0x5c] sm:$0x1]
        %v366 = vld [vmem:[%s325 + $0x68] sm:$0x1]
        %v367 = vld [vmem:[%s325 + $0x74] sm:$0x1]
        %v368 = vld [vmem:[%s325 + $0x80] sm:$0x1]
        %v369 = vld [vmem:[%s325 + $0x8c] sm:$0x1]
        %v370 = vld [vmem:[%s325 + $0x98] sm:$0x1]
        %v371 = vld [vmem:[%s325 + $0xa4] sm:$0x1]
        %v372 = vld [vmem:[%s325 + $0xb0] sm:$0x1]
        %v373 = vld [vmem:[%s325 + $0xbc] sm:$0x1]
        %v374 = vld [vmem:[%s325] sm:$0xe]
        %v375 = vld [vmem:[%s325 + $0xc] sm:$0xe]
        %v376 = vld [vmem:[%s325 + $0x18] sm:$0xe]
        %v377 = vld [vmem:[%s325 + $0x24] sm:$0xe]
        %v378 = vld [vmem:[%s325 + $0x30] sm:$0xe]
        %v379 = vld [vmem:[%s325 + $0x3c] sm:$0xe]
        %v380 = vld [vmem:[%s325 + $0x48] sm:$0xe]
        %v381 = vld [vmem:[%s325 + $0x54] sm:$0xe]
        %v382 = vld [vmem:[%s325 + $0x60] sm:$0xe]
        %v383 = vld [vmem:[%s325 + $0x6c] sm:$0xe]
        %v384 = vld [vmem:[%s325 + $0x78] sm:$0xe]
        %v385 = vld [vmem:[%s325 + $0x84] sm:$0xe]
        %v386 = vld [vmem:[%s325 + $0x90] sm:$0xe]
        %v387 = vld [vmem:[%s325 + $0x9c] sm:$0xe]
        %v388 = vld [vmem:[%s325 + $0xa8] sm:$0xe]
        %v389 = vld [vmem:[%s325 + $0xb4] sm:$0xe]
        %v422 = vunpack.c.l.b16 %v190
        %v423 = vunpack.c.l.b16 %v191
        %v424 = vunpack.c.l.b16 %v192
        %v425 = vunpack.c.l.b16 %v193
        %v426 = vunpack.c.l.b16 %v194
        %v427 = vunpack.c.l.b16 %v195
        %v428 = vunpack.c.l.b16 %v196
        %v429 = vunpack.c.l.b16 %v197
        %v430 = vunpack.c.l.b16 %v198
        %v431 = vunpack.c.l.b16 %v199
        %v432 = vunpack.c.l.b16 %v200
        %v433 = vunpack.c.l.b16 %v201
        %v434 = vunpack.c.l.b16 %v202
        %v435 = vunpack.c.l.b16 %v203
        %v436 = vunpack.c.l.b16 %v204
        %v437 = vunpack.c.l.b16 %v205
        %v438 = vunpack.c.l.b16 %v206
        %v439 = vunpack.c.l.b16 %v207
        %v440 = vunpack.c.l.b16 %v208
        %v441 = vunpack.c.l.b16 %v209
        %v442 = vunpack.c.l.b16 %v210
        %v443 = vunpack.c.l.b16 %v211
        %v444 = vunpack.c.l.b16 %v212
        %v445 = vunpack.c.l.b16 %v213
        %v446 = vunpack.c.l.b16 %v214
        %v447 = vunpack.c.l.b16 %v215
        %v448 = vunpack.c.l.b16 %v216
        %v449 = vunpack.c.l.b16 %v217
        %v450 = vunpack.c.l.b16 %v218
        %v451 = vunpack.c.l.b16 %v219
        %v452 = vunpack.c.l.b16 %v220
        %v453 = vunpack.c.l.b16 %v221
        %v454 = vpack.c.b16 %v423, %v422
        %v455 = vpack.c.b16 %v425, %v424
        %v456 = vpack.c.b16 %v427, %v426
        %v457 = vpack.c.b16 %v429, %v428
        %v458 = vpack.c.b16 %v431, %v430
        %v459 = vpack.c.b16 %v433, %v432
        %v460 = vpack.c.b16 %v435, %v434
        %v461 = vpack.c.b16 %v437, %v436
        %v462 = vpack.c.b16 %v439, %v438
        %v463 = vpack.c.b16 %v441, %v440
        %v464 = vpack.c.b16 %v443, %v442
        %v465 = vpack.c.b16 %v445, %v444
        %v466 = vpack.c.b16 %v447, %v446
        %v467 = vpack.c.b16 %v449, %v448
        %v468 = vpack.c.b16 %v451, %v450
        %v469 = vpack.c.b16 %v453, %v452
        %v486 = vunpack.c.l.b16 %v222
        %v487 = vunpack.c.l.b16 %v223
        %v488 = vunpack.c.l.b16 %v224
        %v489 = vunpack.c.l.b16 %v225
        %v490 = vunpack.c.l.b16 %v226
        %v491 = vunpack.c.l.b16 %v227
        %v492 = vunpack.c.l.b16 %v228
        %v493 = vunpack.c.l.b16 %v229
        %v494 = vunpack.c.l.b16 %v230
        %v495 = vunpack.c.l.b16 %v231
        %v496 = vunpack.c.l.b16 %v232
        %v497 = vunpack.c.l.b16 %v233
        %v498 = vunpack.c.l.b16 %v234
        %v499 = vunpack.c.l.b16 %v235
        %v500 = vunpack.c.l.b16 %v236
        %v501 = vunpack.c.l.b16 %v237
        %v502 = vpack.c.b16 %v486, %v486
        %v503 = vpack.c.b16 %v487, %v487
        %v504 = vpack.c.b16 %v488, %v488
        %v505 = vpack.c.b16 %v489, %v489
        %v506 = vpack.c.b16 %v490, %v490
        %v507 = vpack.c.b16 %v491, %v491
        %v508 = vpack.c.b16 %v492, %v492
        %v509 = vpack.c.b16 %v493, %v493
        %v510 = vpack.c.b16 %v494, %v494
        %v511 = vpack.c.b16 %v495, %v495
        %v512 = vpack.c.b16 %v496, %v496
        %v513 = vpack.c.b16 %v497, %v497
        %v514 = vpack.c.b16 %v498, %v498
        %v515 = vpack.c.b16 %v499, %v499
        %v516 = vpack.c.b16 %v500, %v500
        %v517 = vpack.c.b16 %v501, %v501
        %vm518 = vsmask.f32 7424
        %v520 = vshrl.u32 %v454, 16
        %v522 = vshll.u32 %v454, 16
        %v524 = vrot.slane %v522, 1
        %v525 = vor.u32 %v520, %v524
        %v527 = vshll.u32 %v502, 16
        %v529 = vrot.slane %v527, 1
        %v530 = vsel %vm518, %v525, %v529
        %v532 = vshrl.u32 %v455, 16
        %v534 = vshll.u32 %v455, 16
        %v536 = vrot.slane %v534, 1
        %v537 = vor.u32 %v532, %v536
        %v539 = vshll.u32 %v503, 16
        %v541 = vrot.slane %v539, 1
        %v542 = vsel %vm518, %v537, %v541
        %v544 = vshrl.u32 %v456, 16
        %v546 = vshll.u32 %v456, 16
        %v548 = vrot.slane %v546, 1
        %v549 = vor.u32 %v544, %v548
        %v551 = vshll.u32 %v504, 16
        %v553 = vrot.slane %v551, 1
        %v554 = vsel %vm518, %v549, %v553
        %v556 = vshrl.u32 %v457, 16
        %v558 = vshll.u32 %v457, 16
        %v560 = vrot.slane %v558, 1
        %v561 = vor.u32 %v556, %v560
        %v563 = vshll.u32 %v505, 16
        %v565 = vrot.slane %v563, 1
        %v566 = vsel %vm518, %v561, %v565
        %v568 = vshrl.u32 %v458, 16
        %v570 = vshll.u32 %v458, 16
        %v572 = vrot.slane %v570, 1
        %v573 = vor.u32 %v568, %v572
        %v575 = vshll.u32 %v506, 16
        %v577 = vrot.slane %v575, 1
        %v578 = vsel %vm518, %v573, %v577
        %v580 = vshrl.u32 %v459, 16
        %v582 = vshll.u32 %v459, 16
        %v584 = vrot.slane %v582, 1
        %v585 = vor.u32 %v580, %v584
        %v587 = vshll.u32 %v507, 16
        %v589 = vrot.slane %v587, 1
        %v590 = vsel %vm518, %v585, %v589
        %v592 = vshrl.u32 %v460, 16
        %v594 = vshll.u32 %v460, 16
        %v596 = vrot.slane %v594, 1
        %v597 = vor.u32 %v592, %v596
        %v599 = vshll.u32 %v508, 16
        %v601 = vrot.slane %v599, 1
        %v602 = vsel %vm518, %v597, %v601
        %v604 = vshrl.u32 %v461, 16
        %v606 = vshll.u32 %v461, 16
        %v608 = vrot.slane %v606, 1
        %v609 = vor.u32 %v604, %v608
        %v611 = vshll.u32 %v509, 16
        %v613 = vrot.slane %v611, 1
        %v614 = vsel %vm518, %v609, %v613
        %v616 = vshrl.u32 %v462, 16
        %v618 = vshll.u32 %v462, 16
        %v620 = vrot.slane %v618, 1
        %v621 = vor.u32 %v616, %v620
        %v623 = vshll.u32 %v510, 16
        %v625 = vrot.slane %v623, 1
        %v626 = vsel %vm518, %v621, %v625
        %v628 = vshrl.u32 %v463, 16
        %v630 = vshll.u32 %v463, 16
        %v632 = vrot.slane %v630, 1
        %v633 = vor.u32 %v628, %v632
        %v635 = vshll.u32 %v511, 16
        %v637 = vrot.slane %v635, 1
        %v638 = vsel %vm518, %v633, %v637
        %v640 = vshrl.u32 %v464, 16
        %v642 = vshll.u32 %v464, 16
        %v644 = vrot.slane %v642, 1
        %v645 = vor.u32 %v640, %v644
        %v647 = vshll.u32 %v512, 16
        %v649 = vrot.slane %v647, 1
        %v650 = vsel %vm518, %v645, %v649
        %v652 = vshrl.u32 %v465, 16
        %v654 = vshll.u32 %v465, 16
        %v656 = vrot.slane %v654, 1
        %v657 = vor.u32 %v652, %v656
        %v659 = vshll.u32 %v513, 16
        %v661 = vrot.slane %v659, 1
        %v662 = vsel %vm518, %v657, %v661
        %v664 = vshrl.u32 %v466, 16
        %v666 = vshll.u32 %v466, 16
        %v668 = vrot.slane %v666, 1
        %v669 = vor.u32 %v664, %v668
        %v671 = vshll.u32 %v514, 16
        %v673 = vrot.slane %v671, 1
        %v674 = vsel %vm518, %v669, %v673
        %v676 = vshrl.u32 %v467, 16
        %v678 = vshll.u32 %v467, 16
        %v680 = vrot.slane %v678, 1
        %v681 = vor.u32 %v676, %v680
        %v683 = vshll.u32 %v515, 16
        %v685 = vrot.slane %v683, 1
        %v686 = vsel %vm518, %v681, %v685
        %v688 = vshrl.u32 %v468, 16
        %v690 = vshll.u32 %v468, 16
        %v692 = vrot.slane %v690, 1
        %v693 = vor.u32 %v688, %v692
        %v695 = vshll.u32 %v516, 16
        %v697 = vrot.slane %v695, 1
        %v698 = vsel %vm518, %v693, %v697
        %v700 = vshrl.u32 %v469, 16
        %v702 = vshll.u32 %v469, 16
        %v704 = vrot.slane %v702, 1
        %v705 = vor.u32 %v700, %v704
        %v707 = vshll.u32 %v517, 16
        %v709 = vrot.slane %v707, 1
        %v710 = vsel %vm518, %v705, %v709
        %711 = vrot.lane.b32.xlu0 %v530, 4
        %v712 = vpop.permute.xlu0 %711
        %713 = vrot.lane.b32.xlu0 %v542, 4
        %v714 = vpop.permute.xlu0 %713
        %715 = vrot.lane.b32.xlu0 %v554, 4
        %v716 = vpop.permute.xlu0 %715
        %717 = vrot.lane.b32.xlu0 %v566, 4
        %v718 = vpop.permute.xlu0 %717
        %719 = vrot.lane.b32.xlu0 %v578, 4
        %v720 = vpop.permute.xlu0 %719
        %721 = vrot.lane.b32.xlu0 %v590, 4
        %v722 = vpop.permute.xlu0 %721
        %723 = vrot.lane.b32.xlu0 %v602, 4
        %v724 = vpop.permute.xlu0 %723
        %725 = vrot.lane.b32.xlu0 %v614, 4
        %v726 = vpop.permute.xlu0 %725
        %727 = vrot.lane.b32.xlu0 %v626, 4
        %v728 = vpop.permute.xlu0 %727
        %729 = vrot.lane.b32.xlu0 %v638, 4
        %v730 = vpop.permute.xlu0 %729
        %731 = vrot.lane.b32.xlu0 %v650, 4
        %v732 = vpop.permute.xlu0 %731
        %733 = vrot.lane.b32.xlu0 %v662, 4
        %v734 = vpop.permute.xlu0 %733
        %735 = vrot.lane.b32.xlu0 %v674, 4
        %v736 = vpop.permute.xlu0 %735
        %737 = vrot.lane.b32.xlu0 %v686, 4
        %v738 = vpop.permute.xlu0 %737
        %739 = vrot.lane.b32.xlu0 %v698, 4
        %v740 = vpop.permute.xlu0 %739
        %741 = vrot.lane.b32.xlu0 %v710, 4
        %v742 = vpop.permute.xlu0 %741
        %v759 = vunpack.c.l.b16 %v238
        %v760 = vunpack.c.l.b16 %v239
        %v761 = vunpack.c.l.b16 %v240
        %v762 = vunpack.c.l.b16 %v241
        %v763 = vunpack.c.l.b16 %v242
        %v764 = vunpack.c.l.b16 %v243
        %v765 = vunpack.c.l.b16 %v244
        %v766 = vunpack.c.l.b16 %v245
        %v767 = vunpack.c.l.b16 %v246
        %v768 = vunpack.c.l.b16 %v247
        %v769 = vunpack.c.l.b16 %v248
        %v770 = vunpack.c.l.b16 %v249
        %v771 = vunpack.c.l.b16 %v250
        %v772 = vunpack.c.l.b16 %v251
        %v773 = vunpack.c.l.b16 %v252
        %v774 = vunpack.c.l.b16 %v253
        %v775 = vpack.c.b16 %v423, %v759
        %v776 = vpack.c.b16 %v425, %v760
        %v777 = vpack.c.b16 %v427, %v761
        %v778 = vpack.c.b16 %v429, %v762
        %v779 = vpack.c.b16 %v431, %v763
        %v780 = vpack.c.b16 %v433, %v764
        %v781 = vpack.c.b16 %v435, %v765
        %v782 = vpack.c.b16 %v437, %v766
        %v783 = vpack.c.b16 %v439, %v767
        %v784 = vpack.c.b16 %v441, %v768
        %v785 = vpack.c.b16 %v443, %v769
        %v786 = vpack.c.b16 %v445, %v770
        %v787 = vpack.c.b16 %v447, %v771
        %v788 = vpack.c.b16 %v449, %v772
        %v789 = vpack.c.b16 %v451, %v773
        %v790 = vpack.c.b16 %v453, %v774
        %vm791 = vcmask 1046528
        %v792 = vrot.slane %v775, 1
        %v793 = vrot.slane %v502, 1
        %v794 = vsel %vm791, %v792, %v793
        %v795 = vrot.slane %v776, 1
        %v796 = vrot.slane %v503, 1
        %v797 = vsel %vm791, %v795, %v796
        %v798 = vrot.slane %v777, 1
        %v799 = vrot.slane %v504, 1
        %v800 = vsel %vm791, %v798, %v799
        %v801 = vrot.slane %v778, 1
        %v802 = vrot.slane %v505, 1
        %v803 = vsel %vm791, %v801, %v802
        %v804 = vrot.slane %v779, 1
        %v805 = vrot.slane %v506, 1
        %v806 = vsel %vm791, %v804, %v805
        %v807 = vrot.slane %v780, 1
        %v808 = vrot.slane %v507, 1
        %v809 = vsel %vm791, %v807, %v808
        %v810 = vrot.slane %v781, 1
        %v811 = vrot.slane %v508, 1
        %v812 = vsel %vm791, %v810, %v811
        %v813 = vrot.slane %v782, 1
        %v814 = vrot.slane %v509, 1
        %v815 = vsel %vm791, %v813, %v814
        %v816 = vrot.slane %v783, 1
        %v817 = vrot.slane %v510, 1
        %v818 = vsel %vm791, %v816, %v817
        %v819 = vrot.slane %v784, 1
        %v820 = vrot.slane %v511, 1
        %v821 = vsel %vm791, %v819, %v820
        %v822 = vrot.slane %v785, 1
        %v823 = vrot.slane %v512, 1
        %v824 = vsel %vm791, %v822, %v823
        %v825 = vrot.slane %v786, 1
        %v826 = vrot.slane %v513, 1
        %v827 = vsel %vm791, %v825, %v826
        %v828 = vrot.slane %v787, 1
        %v829 = vrot.slane %v514, 1
        %v830 = vsel %vm791, %v828, %v829
        %v831 = vrot.slane %v788, 1
        %v832 = vrot.slane %v515, 1
        %v833 = vsel %vm791, %v831, %v832
        %v834 = vrot.slane %v789, 1
        %v835 = vrot.slane %v516, 1
        %v836 = vsel %vm791, %v834, %v835
        %v837 = vrot.slane %v790, 1
        %v838 = vrot.slane %v517, 1
        %v839 = vsel %vm791, %v837, %v838
        %840 = vrot.lane.b32.xlu0 %v794, 8
        %v841 = vpop.permute.xlu0 %840
        %842 = vrot.lane.b32.xlu0 %v797, 8
        %v843 = vpop.permute.xlu0 %842
        %844 = vrot.lane.b32.xlu0 %v800, 8
        %v845 = vpop.permute.xlu0 %844
        %846 = vrot.lane.b32.xlu0 %v803, 8
        %v847 = vpop.permute.xlu0 %846
        %848 = vrot.lane.b32.xlu0 %v806, 8
        %v849 = vpop.permute.xlu0 %848
        %850 = vrot.lane.b32.xlu0 %v809, 8
        %v851 = vpop.permute.xlu0 %850
        %852 = vrot.lane.b32.xlu0 %v812, 8
        %v853 = vpop.permute.xlu0 %852
        %854 = vrot.lane.b32.xlu0 %v815, 8
        %v855 = vpop.permute.xlu0 %854
        %856 = vrot.lane.b32.xlu0 %v818, 8
        %v857 = vpop.permute.xlu0 %856
        %858 = vrot.lane.b32.xlu0 %v821, 8
        %v859 = vpop.permute.xlu0 %858
        %860 = vrot.lane.b32.xlu0 %v824, 8
        %v861 = vpop.permute.xlu0 %860
        %862 = vrot.lane.b32.xlu0 %v827, 8
        %v863 = vpop.permute.xlu0 %862
        %864 = vrot.lane.b32.xlu0 %v830, 8
        %v865 = vpop.permute.xlu0 %864
        %866 = vrot.lane.b32.xlu0 %v833, 8
        %v867 = vpop.permute.xlu0 %866
        %868 = vrot.lane.b32.xlu0 %v836, 8
        %v869 = vpop.permute.xlu0 %868
        %870 = vrot.lane.b32.xlu0 %v839, 8
        %v871 = vpop.permute.xlu0 %870
        %v904 = vunpack.c.l.b16 %v258
        %v905 = vunpack.c.l.b16 %v259
        %v906 = vunpack.c.l.b16 %v260
        %v907 = vunpack.c.l.b16 %v261
        %v908 = vunpack.c.l.b16 %v262
        %v909 = vunpack.c.l.b16 %v263
        %v910 = vunpack.c.l.b16 %v264
        %v911 = vunpack.c.l.b16 %v265
        %v912 = vunpack.c.l.b16 %v266
        %v913 = vunpack.c.l.b16 %v267
        %v914 = vunpack.c.l.b16 %v268
        %v915 = vunpack.c.l.b16 %v269
        %v916 = vunpack.c.l.b16 %v270
        %v917 = vunpack.c.l.b16 %v271
        %v918 = vunpack.c.l.b16 %v272
        %v919 = vunpack.c.l.b16 %v273
        %v920 = vunpack.c.l.b16 %v274
        %v921 = vunpack.c.l.b16 %v275
        %v922 = vunpack.c.l.b16 %v276
        %v923 = vunpack.c.l.b16 %v277
        %v924 = vunpack.c.l.b16 %v278
        %v925 = vunpack.c.l.b16 %v279
        %v926 = vunpack.c.l.b16 %v280
        %v927 = vunpack.c.l.b16 %v281
        %v928 = vunpack.c.l.b16 %v282
        %v929 = vunpack.c.l.b16 %v283
        %v930 = vunpack.c.l.b16 %v284
        %v931 = vunpack.c.l.b16 %v285
        %v932 = vunpack.c.l.b16 %v286
        %v933 = vunpack.c.l.b16 %v287
        %v934 = vunpack.c.l.b16 %v288
        %v935 = vunpack.c.l.b16 %v289
        %v936 = vpack.c.b16 %v905, %v904
        %v937 = vpack.c.b16 %v907, %v906
        %v938 = vpack.c.b16 %v909, %v908
        %v939 = vpack.c.b16 %v911, %v910
        %v940 = vpack.c.b16 %v913, %v912
        %v941 = vpack.c.b16 %v915, %v914
        %v942 = vpack.c.b16 %v917, %v916
        %v943 = vpack.c.b16 %v919, %v918
        %v944 = vpack.c.b16 %v921, %v920
        %v945 = vpack.c.b16 %v923, %v922
        %v946 = vpack.c.b16 %v925, %v924
        %v947 = vpack.c.b16 %v927, %v926
        %v948 = vpack.c.b16 %v929, %v928
        %v949 = vpack.c.b16 %v931, %v930
        %v950 = vpack.c.b16 %v933, %v932
        %v951 = vpack.c.b16 %v935, %v934
        %952 = vrot.lane.b32.xlu0 %v936, 12
        %v953 = vpop.permute.xlu0 %952
        %954 = vrot.lane.b32.xlu0 %v937, 12
        %v955 = vpop.permute.xlu0 %954
        %956 = vrot.lane.b32.xlu0 %v938, 12
        %v957 = vpop.permute.xlu0 %956
        %958 = vrot.lane.b32.xlu0 %v939, 12
        %v959 = vpop.permute.xlu0 %958
        %960 = vrot.lane.b32.xlu0 %v940, 12
        %v961 = vpop.permute.xlu0 %960
        %962 = vrot.lane.b32.xlu0 %v941, 12
        %v963 = vpop.permute.xlu0 %962
        %964 = vrot.lane.b32.xlu0 %v942, 12
        %v965 = vpop.permute.xlu0 %964
        %966 = vrot.lane.b32.xlu0 %v943, 12
        %v967 = vpop.permute.xlu0 %966
        %968 = vrot.lane.b32.xlu0 %v944, 12
        %v969 = vpop.permute.xlu0 %968
        %970 = vrot.lane.b32.xlu0 %v945, 12
        %v971 = vpop.permute.xlu0 %970
        %972 = vrot.lane.b32.xlu0 %v946, 12
        %v973 = vpop.permute.xlu0 %972
        %974 = vrot.lane.b32.xlu0 %v947, 12
        %v975 = vpop.permute.xlu0 %974
        %976 = vrot.lane.b32.xlu0 %v948, 12
        %v977 = vpop.permute.xlu0 %976
        %978 = vrot.lane.b32.xlu0 %v949, 12
        %v979 = vpop.permute.xlu0 %978
        %980 = vrot.lane.b32.xlu0 %v950, 12
        %v981 = vpop.permute.xlu0 %980
        %982 = vrot.lane.b32.xlu0 %v951, 12
        %v983 = vpop.permute.xlu0 %982
        %v1000 = vunpack.c.l.b16 %v290
        %v1001 = vunpack.c.l.b16 %v291
        %v1002 = vunpack.c.l.b16 %v292
        %v1003 = vunpack.c.l.b16 %v293
        %v1004 = vunpack.c.l.b16 %v294
        %v1005 = vunpack.c.l.b16 %v295
        %v1006 = vunpack.c.l.b16 %v296
        %v1007 = vunpack.c.l.b16 %v297
        %v1008 = vunpack.c.l.b16 %v298
        %v1009 = vunpack.c.l.b16 %v299
        %v1010 = vunpack.c.l.b16 %v300
        %v1011 = vunpack.c.l.b16 %v301
        %v1012 = vunpack.c.l.b16 %v302
        %v1013 = vunpack.c.l.b16 %v303
        %v1014 = vunpack.c.l.b16 %v304
        %v1015 = vunpack.c.l.b16 %v305
        %v1016 = vpack.c.b16 %v1000, %v1000
        %v1017 = vpack.c.b16 %v1001, %v1001
        %v1018 = vpack.c.b16 %v1002, %v1002
        %v1019 = vpack.c.b16 %v1003, %v1003
        %v1020 = vpack.c.b16 %v1004, %v1004
        %v1021 = vpack.c.b16 %v1005, %v1005
        %v1022 = vpack.c.b16 %v1006, %v1006
        %v1023 = vpack.c.b16 %v1007, %v1007
        %v1024 = vpack.c.b16 %v1008, %v1008
        %v1025 = vpack.c.b16 %v1009, %v1009
        %v1026 = vpack.c.b16 %v1010, %v1010
        %v1027 = vpack.c.b16 %v1011, %v1011
        %v1028 = vpack.c.b16 %v1012, %v1012
        %v1029 = vpack.c.b16 %v1013, %v1013
        %v1030 = vpack.c.b16 %v1014, %v1014
        %v1031 = vpack.c.b16 %v1015, %v1015
        %v1033 = vshrl.u32 %v936, 16
        %v1035 = vshll.u32 %v936, 16
        %v1037 = vrot.slane %v1035, 1
        %v1038 = vor.u32 %v1033, %v1037
        %v1040 = vshll.u32 %v1016, 16
        %v1042 = vrot.slane %v1040, 1
        %v1043 = vsel %vm518, %v1038, %v1042
        %v1045 = vshrl.u32 %v937, 16
        %v1047 = vshll.u32 %v937, 16
        %v1049 = vrot.slane %v1047, 1
        %v1050 = vor.u32 %v1045, %v1049
        %v1052 = vshll.u32 %v1017, 16
        %v1054 = vrot.slane %v1052, 1
        %v1055 = vsel %vm518, %v1050, %v1054
        %v1057 = vshrl.u32 %v938, 16
        %v1059 = vshll.u32 %v938, 16
        %v1061 = vrot.slane %v1059, 1
        %v1062 = vor.u32 %v1057, %v1061
        %v1064 = vshll.u32 %v1018, 16
        %v1066 = vrot.slane %v1064, 1
        %v1067 = vsel %vm518, %v1062, %v1066
        %v1069 = vshrl.u32 %v939, 16
        %v1071 = vshll.u32 %v939, 16
        %v1073 = vrot.slane %v1071, 1
        %v1074 = vor.u32 %v1069, %v1073
        %v1076 = vshll.u32 %v1019, 16
        %v1078 = vrot.slane %v1076, 1
        %v1079 = vsel %vm518, %v1074, %v1078
        %v1081 = vshrl.u32 %v940, 16
        %v1083 = vshll.u32 %v940, 16
        %v1085 = vrot.slane %v1083, 1
        %v1086 = vor.u32 %v1081, %v1085
        %v1088 = vshll.u32 %v1020, 16
        %v1090 = vrot.slane %v1088, 1
        %v1091 = vsel %vm518, %v1086, %v1090
        %v1093 = vshrl.u32 %v941, 16
        %v1095 = vshll.u32 %v941, 16
        %v1097 = vrot.slane %v1095, 1
        %v1098 = vor.u32 %v1093, %v1097
        %v1100 = vshll.u32 %v1021, 16
        %v1102 = vrot.slane %v1100, 1
        %v1103 = vsel %vm518, %v1098, %v1102
        %v1105 = vshrl.u32 %v942, 16
        %v1107 = vshll.u32 %v942, 16
        %v1109 = vrot.slane %v1107, 1
        %v1110 = vor.u32 %v1105, %v1109
        %v1112 = vshll.u32 %v1022, 16
        %v1114 = vrot.slane %v1112, 1
        %v1115 = vsel %vm518, %v1110, %v1114
        %v1117 = vshrl.u32 %v943, 16
        %v1119 = vshll.u32 %v943, 16
        %v1121 = vrot.slane %v1119, 1
        %v1122 = vor.u32 %v1117, %v1121
        %v1124 = vshll.u32 %v1023, 16
        %v1126 = vrot.slane %v1124, 1
        %v1127 = vsel %vm518, %v1122, %v1126
        %v1129 = vshrl.u32 %v944, 16
        %v1131 = vshll.u32 %v944, 16
        %v1133 = vrot.slane %v1131, 1
        %v1134 = vor.u32 %v1129, %v1133
        %v1136 = vshll.u32 %v1024, 16
        %v1138 = vrot.slane %v1136, 1
        %v1139 = vsel %vm518, %v1134, %v1138
        %v1141 = vshrl.u32 %v945, 16
        %v1143 = vshll.u32 %v945, 16
        %v1145 = vrot.slane %v1143, 1
        %v1146 = vor.u32 %v1141, %v1145
        %v1148 = vshll.u32 %v1025, 16
        %v1150 = vrot.slane %v1148, 1
        %v1151 = vsel %vm518, %v1146, %v1150
        %v1153 = vshrl.u32 %v946, 16
        %v1155 = vshll.u32 %v946, 16
        %v1157 = vrot.slane %v1155, 1
        %v1158 = vor.u32 %v1153, %v1157
        %v1160 = vshll.u32 %v1026, 16
        %v1162 = vrot.slane %v1160, 1
        %v1163 = vsel %vm518, %v1158, %v1162
        %v1165 = vshrl.u32 %v947, 16
        %v1167 = vshll.u32 %v947, 16
        %v1169 = vrot.slane %v1167, 1
        %v1170 = vor.u32 %v1165, %v1169
        %v1172 = vshll.u32 %v1027, 16
        %v1174 = vrot.slane %v1172, 1
        %v1175 = vsel %vm518, %v1170, %v1174
        %v1177 = vshrl.u32 %v948, 16
        %v1179 = vshll.u32 %v948, 16
        %v1181 = vrot.slane %v1179, 1
        %v1182 = vor.u32 %v1177, %v1181
        %v1184 = vshll.u32 %v1028, 16
        %v1186 = vrot.slane %v1184, 1
        %v1187 = vsel %vm518, %v1182, %v1186
        %v1189 = vshrl.u32 %v949, 16
        %v1191 = vshll.u32 %v949, 16
        %v1193 = vrot.slane %v1191, 1
        %v1194 = vor.u32 %v1189, %v1193
        %v1196 = vshll.u32 %v1029, 16
        %v1198 = vrot.slane %v1196, 1
        %v1199 = vsel %vm518, %v1194, %v1198
        %v1201 = vshrl.u32 %v950, 16
        %v1203 = vshll.u32 %v950, 16
        %v1205 = vrot.slane %v1203, 1
        %v1206 = vor.u32 %v1201, %v1205
        %v1208 = vshll.u32 %v1030, 16
        %v1210 = vrot.slane %v1208, 1
        %v1211 = vsel %vm518, %v1206, %v1210
        %v1213 = vshrl.u32 %v951, 16
        %v1215 = vshll.u32 %v951, 16
        %v1217 = vrot.slane %v1215, 1
        %v1218 = vor.u32 %v1213, %v1217
        %v1220 = vshll.u32 %v1031, 16
        %v1222 = vrot.slane %v1220, 1
        %v1223 = vsel %vm518, %v1218, %v1222
        %1224 = vrot.lane.b32.xlu0 %v1043, 16
        %v1225 = vpop.permute.xlu0 %1224
        %1226 = vrot.lane.b32.xlu0 %v1055, 16
        %v1227 = vpop.permute.xlu0 %1226
        %1228 = vrot.lane.b32.xlu0 %v1067, 16
        %v1229 = vpop.permute.xlu0 %1228
        %1230 = vrot.lane.b32.xlu0 %v1079, 16
        %v1231 = vpop.permute.xlu0 %1230
        %1232 = vrot.lane.b32.xlu0 %v1091, 16
        %v1233 = vpop.permute.xlu0 %1232
        %1234 = vrot.lane.b32.xlu0 %v1103, 16
        %v1235 = vpop.permute.xlu0 %1234
        %1236 = vrot.lane.b32.xlu0 %v1115, 16
        %v1237 = vpop.permute.xlu0 %1236
        %1238 = vrot.lane.b32.xlu0 %v1127, 16
        %v1239 = vpop.permute.xlu0 %1238
        %1240 = vrot.lane.b32.xlu0 %v1139, 16
        %v1241 = vpop.permute.xlu0 %1240
        %1242 = vrot.lane.b32.xlu0 %v1151, 16
        %v1243 = vpop.permute.xlu0 %1242
        %1244 = vrot.lane.b32.xlu0 %v1163, 16
        %v1245 = vpop.permute.xlu0 %1244
        %1246 = vrot.lane.b32.xlu0 %v1175, 16
        %v1247 = vpop.permute.xlu0 %1246
        %1248 = vrot.lane.b32.xlu0 %v1187, 16
        %v1249 = vpop.permute.xlu0 %1248
        %1250 = vrot.lane.b32.xlu0 %v1199, 16
        %v1251 = vpop.permute.xlu0 %1250
        %1252 = vrot.lane.b32.xlu0 %v1211, 16
        %v1253 = vpop.permute.xlu0 %1252
        %1254 = vrot.lane.b32.xlu0 %v1223, 16
        %v1255 = vpop.permute.xlu0 %1254
        %v1272 = vunpack.c.l.b16 %v306
        %v1273 = vunpack.c.l.b16 %v307
        %v1274 = vunpack.c.l.b16 %v308
        %v1275 = vunpack.c.l.b16 %v309
        %v1276 = vunpack.c.l.b16 %v310
        %v1277 = vunpack.c.l.b16 %v311
        %v1278 = vunpack.c.l.b16 %v312
        %v1279 = vunpack.c.l.b16 %v313
        %v1280 = vunpack.c.l.b16 %v314
        %v1281 = vunpack.c.l.b16 %v315
        %v1282 = vunpack.c.l.b16 %v316
        %v1283 = vunpack.c.l.b16 %v317
        %v1284 = vunpack.c.l.b16 %v318
        %v1285 = vunpack.c.l.b16 %v319
        %v1286 = vunpack.c.l.b16 %v320
        %v1287 = vunpack.c.l.b16 %v321
        %v1288 = vpack.c.b16 %v905, %v1272
        %v1289 = vpack.c.b16 %v907, %v1273
        %v1290 = vpack.c.b16 %v909, %v1274
        %v1291 = vpack.c.b16 %v911, %v1275
        %v1292 = vpack.c.b16 %v913, %v1276
        %v1293 = vpack.c.b16 %v915, %v1277
        %v1294 = vpack.c.b16 %v917, %v1278
        %v1295 = vpack.c.b16 %v919, %v1279
        %v1296 = vpack.c.b16 %v921, %v1280
        %v1297 = vpack.c.b16 %v923, %v1281
        %v1298 = vpack.c.b16 %v925, %v1282
        %v1299 = vpack.c.b16 %v927, %v1283
        %v1300 = vpack.c.b16 %v929, %v1284
        %v1301 = vpack.c.b16 %v931, %v1285
        %v1302 = vpack.c.b16 %v933, %v1286
        %v1303 = vpack.c.b16 %v935, %v1287
        %v1304 = vrot.slane %v1288, 1
        %v1305 = vrot.slane %v1016, 1
        %v1306 = vsel %vm791, %v1304, %v1305
        %v1307 = vrot.slane %v1289, 1
        %v1308 = vrot.slane %v1017, 1
        %v1309 = vsel %vm791, %v1307, %v1308
        %v1310 = vrot.slane %v1290, 1
        %v1311 = vrot.slane %v1018, 1
        %v1312 = vsel %vm791, %v1310, %v1311
        %v1313 = vrot.slane %v1291, 1
        %v1314 = vrot.slane %v1019, 1
        %v1315 = vsel %vm791, %v1313, %v1314
        %v1316 = vrot.slane %v1292, 1
        %v1317 = vrot.slane %v1020, 1
        %v1318 = vsel %vm791, %v1316, %v1317
        %v1319 = vrot.slane %v1293, 1
        %v1320 = vrot.slane %v1021, 1
        %v1321 = vsel %vm791, %v1319, %v1320
        %v1322 = vrot.slane %v1294, 1
        %v1323 = vrot.slane %v1022, 1
        %v1324 = vsel %vm791, %v1322, %v1323
        %v1325 = vrot.slane %v1295, 1
        %v1326 = vrot.slane %v1023, 1
        %v1327 = vsel %vm791, %v1325, %v1326
        %v1328 = vrot.slane %v1296, 1
        %v1329 = vrot.slane %v1024, 1
        %v1330 = vsel %vm791, %v1328, %v1329
        %v1331 = vrot.slane %v1297, 1
        %v1332 = vrot.slane %v1025, 1
        %v1333 = vsel %vm791, %v1331, %v1332
        %v1334 = vrot.slane %v1298, 1
        %v1335 = vrot.slane %v1026, 1
        %v1336 = vsel %vm791, %v1334, %v1335
        %v1337 = vrot.slane %v1299, 1
        %v1338 = vrot.slane %v1027, 1
        %v1339 = vsel %vm791, %v1337, %v1338
        %v1340 = vrot.slane %v1300, 1
        %v1341 = vrot.slane %v1028, 1
        %v1342 = vsel %vm791, %v1340, %v1341
        %v1343 = vrot.slane %v1301, 1
        %v1344 = vrot.slane %v1029, 1
        %v1345 = vsel %vm791, %v1343, %v1344
        %v1346 = vrot.slane %v1302, 1
        %v1347 = vrot.slane %v1030, 1
        %v1348 = vsel %vm791, %v1346, %v1347
        %v1349 = vrot.slane %v1303, 1
        %v1350 = vrot.slane %v1031, 1
        %v1351 = vsel %vm791, %v1349, %v1350
        %1352 = vrot.lane.b32.xlu0 %v1306, 20
        %v1353 = vpop.permute.xlu0 %1352
        %1354 = vrot.lane.b32.xlu0 %v1309, 20
        %v1355 = vpop.permute.xlu0 %1354
        %1356 = vrot.lane.b32.xlu0 %v1312, 20
        %v1357 = vpop.permute.xlu0 %1356
        %1358 = vrot.lane.b32.xlu0 %v1315, 20
        %v1359 = vpop.permute.xlu0 %1358
        %1360 = vrot.lane.b32.xlu0 %v1318, 20
        %v1361 = vpop.permute.xlu0 %1360
        %1362 = vrot.lane.b32.xlu0 %v1321, 20
        %v1363 = vpop.permute.xlu0 %1362
        %1364 = vrot.lane.b32.xlu0 %v1324, 20
        %v1365 = vpop.permute.xlu0 %1364
        %1366 = vrot.lane.b32.xlu0 %v1327, 20
        %v1367 = vpop.permute.xlu0 %1366
        %1368 = vrot.lane.b32.xlu0 %v1330, 20
        %v1369 = vpop.permute.xlu0 %1368
        %1370 = vrot.lane.b32.xlu0 %v1333, 20
        %v1371 = vpop.permute.xlu0 %1370
        %1372 = vrot.lane.b32.xlu0 %v1336, 20
        %v1373 = vpop.permute.xlu0 %1372
        %1374 = vrot.lane.b32.xlu0 %v1339, 20
        %v1375 = vpop.permute.xlu0 %1374
        %1376 = vrot.lane.b32.xlu0 %v1342, 20
        %v1377 = vpop.permute.xlu0 %1376
        %1378 = vrot.lane.b32.xlu0 %v1345, 20
        %v1379 = vpop.permute.xlu0 %1378
        %1380 = vrot.lane.b32.xlu0 %v1348, 20
        %v1381 = vpop.permute.xlu0 %1380
        %1382 = vrot.lane.b32.xlu0 %v1351, 20
        %v1383 = vpop.permute.xlu0 %1382
        %v1416 = vunpack.c.l.b16 %v326
        %v1417 = vunpack.c.l.b16 %v327
        %v1418 = vunpack.c.l.b16 %v328
        %v1419 = vunpack.c.l.b16 %v329
        %v1420 = vunpack.c.l.b16 %v330
        %v1421 = vunpack.c.l.b16 %v331
        %v1422 = vunpack.c.l.b16 %v332
        %v1423 = vunpack.c.l.b16 %v333
        %v1424 = vunpack.c.l.b16 %v334
        %v1425 = vunpack.c.l.b16 %v335
        %v1426 = vunpack.c.l.b16 %v336
        %v1427 = vunpack.c.l.b16 %v337
        %v1428 = vunpack.c.l.b16 %v338
        %v1429 = vunpack.c.l.b16 %v339
        %v1430 = vunpack.c.l.b16 %v340
        %v1431 = vunpack.c.l.b16 %v341
        %v1432 = vunpack.c.l.b16 %v342
        %v1433 = vunpack.c.l.b16 %v343
        %v1434 = vunpack.c.l.b16 %v344
        %v1435 = vunpack.c.l.b16 %v345
        %v1436 = vunpack.c.l.b16 %v346
        %v1437 = vunpack.c.l.b16 %v347
        %v1438 = vunpack.c.l.b16 %v348
        %v1439 = vunpack.c.l.b16 %v349
        %v1440 = vunpack.c.l.b16 %v350
        %v1441 = vunpack.c.l.b16 %v351
        %v1442 = vunpack.c.l.b16 %v352
        %v1443 = vunpack.c.l.b16 %v353
        %v1444 = vunpack.c.l.b16 %v354
        %v1445 = vunpack.c.l.b16 %v355
        %v1446 = vunpack.c.l.b16 %v356
        %v1447 = vunpack.c.l.b16 %v357
        %v1448 = vpack.c.b16 %v1417, %v1416
        %v1449 = vpack.c.b16 %v1419, %v1418
        %v1450 = vpack.c.b16 %v1421, %v1420
        %v1451 = vpack.c.b16 %v1423, %v1422
        %v1452 = vpack.c.b16 %v1425, %v1424
        %v1453 = vpack.c.b16 %v1427, %v1426
        %v1454 = vpack.c.b16 %v1429, %v1428
        %v1455 = vpack.c.b16 %v1431, %v1430
        %v1456 = vpack.c.b16 %v1433, %v1432
        %v1457 = vpack.c.b16 %v1435, %v1434
        %v1458 = vpack.c.b16 %v1437, %v1436
        %v1459 = vpack.c.b16 %v1439, %v1438
        %v1460 = vpack.c.b16 %v1441, %v1440
        %v1461 = vpack.c.b16 %v1443, %v1442
        %v1462 = vpack.c.b16 %v1445, %v1444
        %v1463 = vpack.c.b16 %v1447, %v1446
        %1464 = vrot.lane.b32.xlu0 %v1448, 24
        %v1465 = vpop.permute.xlu0 %1464
        %1466 = vrot.lane.b32.xlu0 %v1449, 24
        %v1467 = vpop.permute.xlu0 %1466
        %1468 = vrot.lane.b32.xlu0 %v1450, 24
        %v1469 = vpop.permute.xlu0 %1468
        %1470 = vrot.lane.b32.xlu0 %v1451, 24
        %v1471 = vpop.permute.xlu0 %1470
        %1472 = vrot.lane.b32.xlu0 %v1452, 24
        %v1473 = vpop.permute.xlu0 %1472
        %1474 = vrot.lane.b32.xlu0 %v1453, 24
        %v1475 = vpop.permute.xlu0 %1474
        %1476 = vrot.lane.b32.xlu0 %v1454, 24
        %v1477 = vpop.permute.xlu0 %1476
        %1478 = vrot.lane.b32.xlu0 %v1455, 24
        %v1479 = vpop.permute.xlu0 %1478
        %1480 = vrot.lane.b32.xlu0 %v1456, 24
        %v1481 = vpop.permute.xlu0 %1480
        %1482 = vrot.lane.b32.xlu0 %v1457, 24
        %v1483 = vpop.permute.xlu0 %1482
        %1484 = vrot.lane.b32.xlu0 %v1458, 24
        %v1485 = vpop.permute.xlu0 %1484
        %1486 = vrot.lane.b32.xlu0 %v1459, 24
        %v1487 = vpop.permute.xlu0 %1486
        %1488 = vrot.lane.b32.xlu0 %v1460, 24
        %v1489 = vpop.permute.xlu0 %1488
        %1490 = vrot.lane.b32.xlu0 %v1461, 24
        %v1491 = vpop.permute.xlu0 %1490
        %1492 = vrot.lane.b32.xlu0 %v1462, 24
        %v1493 = vpop.permute.xlu0 %1492
        %1494 = vrot.lane.b32.xlu0 %v1463, 24
        %v1495 = vpop.permute.xlu0 %1494
        %v1512 = vunpack.c.l.b16 %v358
        %v1513 = vunpack.c.l.b16 %v359
        %v1514 = vunpack.c.l.b16 %v360
        %v1515 = vunpack.c.l.b16 %v361
        %v1516 = vunpack.c.l.b16 %v362
        %v1517 = vunpack.c.l.b16 %v363
        %v1518 = vunpack.c.l.b16 %v364
        %v1519 = vunpack.c.l.b16 %v365
        %v1520 = vunpack.c.l.b16 %v366
        %v1521 = vunpack.c.l.b16 %v367
        %v1522 = vunpack.c.l.b16 %v368
        %v1523 = vunpack.c.l.b16 %v369
        %v1524 = vunpack.c.l.b16 %v370
        %v1525 = vunpack.c.l.b16 %v371
        %v1526 = vunpack.c.l.b16 %v372
        %v1527 = vunpack.c.l.b16 %v373
        %v1528 = vpack.c.b16 %v1512, %v1512
        %v1529 = vpack.c.b16 %v1513, %v1513
        %v1530 = vpack.c.b16 %v1514, %v1514
        %v1531 = vpack.c.b16 %v1515, %v1515
        %v1532 = vpack.c.b16 %v1516, %v1516
        %v1533 = vpack.c.b16 %v1517, %v1517
        %v1534 = vpack.c.b16 %v1518, %v1518
        %v1535 = vpack.c.b16 %v1519, %v1519
        %v1536 = vpack.c.b16 %v1520, %v1520
        %v1537 = vpack.c.b16 %v1521, %v1521
        %v1538 = vpack.c.b16 %v1522, %v1522
        %v1539 = vpack.c.b16 %v1523, %v1523
        %v1540 = vpack.c.b16 %v1524, %v1524
        %v1541 = vpack.c.b16 %v1525, %v1525
        %v1542 = vpack.c.b16 %v1526, %v1526
        %v1543 = vpack.c.b16 %v1527, %v1527
        %v1545 = vshrl.u32 %v1448, 16
        %v1547 = vshll.u32 %v1448, 16
        %v1549 = vrot.slane %v1547, 1
        %v1550 = vor.u32 %v1545, %v1549
        %v1552 = vshll.u32 %v1528, 16
        %v1554 = vrot.slane %v1552, 1
        %v1555 = vsel %vm518, %v1550, %v1554
        %v1557 = vshrl.u32 %v1449, 16
        %v1559 = vshll.u32 %v1449, 16
        %v1561 = vrot.slane %v1559, 1
        %v1562 = vor.u32 %v1557, %v1561
        %v1564 = vshll.u32 %v1529, 16
        %v1566 = vrot.slane %v1564, 1
        %v1567 = vsel %vm518, %v1562, %v1566
        %v1569 = vshrl.u32 %v1450, 16
        %v1571 = vshll.u32 %v1450, 16
        %v1573 = vrot.slane %v1571, 1
        %v1574 = vor.u32 %v1569, %v1573
        %v1576 = vshll.u32 %v1530, 16
        %v1578 = vrot.slane %v1576, 1
        %v1579 = vsel %vm518, %v1574, %v1578
        %v1581 = vshrl.u32 %v1451, 16
        %v1583 = vshll.u32 %v1451, 16
        %v1585 = vrot.slane %v1583, 1
        %v1586 = vor.u32 %v1581, %v1585
        %v1588 = vshll.u32 %v1531, 16
        %v1590 = vrot.slane %v1588, 1
        %v1591 = vsel %vm518, %v1586, %v1590
        %v1593 = vshrl.u32 %v1452, 16
        %v1595 = vshll.u32 %v1452, 16
        %v1597 = vrot.slane %v1595, 1
        %v1598 = vor.u32 %v1593, %v1597
        %v1600 = vshll.u32 %v1532, 16
        %v1602 = vrot.slane %v1600, 1
        %v1603 = vsel %vm518, %v1598, %v1602
        %v1605 = vshrl.u32 %v1453, 16
        %v1607 = vshll.u32 %v1453, 16
        %v1609 = vrot.slane %v1607, 1
        %v1610 = vor.u32 %v1605, %v1609
        %v1612 = vshll.u32 %v1533, 16
        %v1614 = vrot.slane %v1612, 1
        %v1615 = vsel %vm518, %v1610, %v1614
        %v1617 = vshrl.u32 %v1454, 16
        %v1619 = vshll.u32 %v1454, 16
        %v1621 = vrot.slane %v1619, 1
        %v1622 = vor.u32 %v1617, %v1621
        %v1624 = vshll.u32 %v1534, 16
        %v1626 = vrot.slane %v1624, 1
        %v1627 = vsel %vm518, %v1622, %v1626
        %v1629 = vshrl.u32 %v1455, 16
        %v1631 = vshll.u32 %v1455, 16
        %v1633 = vrot.slane %v1631, 1
        %v1634 = vor.u32 %v1629, %v1633
        %v1636 = vshll.u32 %v1535, 16
        %v1638 = vrot.slane %v1636, 1
        %v1639 = vsel %vm518, %v1634, %v1638
        %v1641 = vshrl.u32 %v1456, 16
        %v1643 = vshll.u32 %v1456, 16
        %v1645 = vrot.slane %v1643, 1
        %v1646 = vor.u32 %v1641, %v1645
        %v1648 = vshll.u32 %v1536, 16
        %v1650 = vrot.slane %v1648, 1
        %v1651 = vsel %vm518, %v1646, %v1650
        %v1653 = vshrl.u32 %v1457, 16
        %v1655 = vshll.u32 %v1457, 16
        %v1657 = vrot.slane %v1655, 1
        %v1658 = vor.u32 %v1653, %v1657
        %v1660 = vshll.u32 %v1537, 16
        %v1662 = vrot.slane %v1660, 1
        %v1663 = vsel %vm518, %v1658, %v1662
        %v1665 = vshrl.u32 %v1458, 16
        %v1667 = vshll.u32 %v1458, 16
        %v1669 = vrot.slane %v1667, 1
        %v1670 = vor.u32 %v1665, %v1669
        %v1672 = vshll.u32 %v1538, 16
        %v1674 = vrot.slane %v1672, 1
        %v1675 = vsel %vm518, %v1670, %v1674
        %v1677 = vshrl.u32 %v1459, 16
        %v1679 = vshll.u32 %v1459, 16
        %v1681 = vrot.slane %v1679, 1
        %v1682 = vor.u32 %v1677, %v1681
        %v1684 = vshll.u32 %v1539, 16
        %v1686 = vrot.slane %v1684, 1
        %v1687 = vsel %vm518, %v1682, %v1686
        %v1689 = vshrl.u32 %v1460, 16
        %v1691 = vshll.u32 %v1460, 16
        %v1693 = vrot.slane %v1691, 1
        %v1694 = vor.u32 %v1689, %v1693
        %v1696 = vshll.u32 %v1540, 16
        %v1698 = vrot.slane %v1696, 1
        %v1699 = vsel %vm518, %v1694, %v1698
        %v1701 = vshrl.u32 %v1461, 16
        %v1703 = vshll.u32 %v1461, 16
        %v1705 = vrot.slane %v1703, 1
        %v1706 = vor.u32 %v1701, %v1705
        %v1708 = vshll.u32 %v1541, 16
        %v1710 = vrot.slane %v1708, 1
        %v1711 = vsel %vm518, %v1706, %v1710
        %v1713 = vshrl.u32 %v1462, 16
        %v1715 = vshll.u32 %v1462, 16
        %v1717 = vrot.slane %v1715, 1
        %v1718 = vor.u32 %v1713, %v1717
        %v1720 = vshll.u32 %v1542, 16
        %v1722 = vrot.slane %v1720, 1
        %v1723 = vsel %vm518, %v1718, %v1722
        %v1725 = vshrl.u32 %v1463, 16
        %v1727 = vshll.u32 %v1463, 16
        %v1729 = vrot.slane %v1727, 1
        %v1730 = vor.u32 %v1725, %v1729
        %v1732 = vshll.u32 %v1543, 16
        %v1734 = vrot.slane %v1732, 1
        %v1735 = vsel %vm518, %v1730, %v1734
        %1736 = vrot.lane.b32.xlu0 %v1555, 28
        %v1737 = vpop.permute.xlu0 %1736
        %1738 = vrot.lane.b32.xlu0 %v1567, 28
        %v1739 = vpop.permute.xlu0 %1738
        %1740 = vrot.lane.b32.xlu0 %v1579, 28
        %v1741 = vpop.permute.xlu0 %1740
        %1742 = vrot.lane.b32.xlu0 %v1591, 28
        %v1743 = vpop.permute.xlu0 %1742
        %1744 = vrot.lane.b32.xlu0 %v1603, 28
        %v1745 = vpop.permute.xlu0 %1744
        %1746 = vrot.lane.b32.xlu0 %v1615, 28
        %v1747 = vpop.permute.xlu0 %1746
        %1748 = vrot.lane.b32.xlu0 %v1627, 28
        %v1749 = vpop.permute.xlu0 %1748
        %1750 = vrot.lane.b32.xlu0 %v1639, 28
        %v1751 = vpop.permute.xlu0 %1750
        %1752 = vrot.lane.b32.xlu0 %v1651, 28
        %v1753 = vpop.permute.xlu0 %1752
        %1754 = vrot.lane.b32.xlu0 %v1663, 28
        %v1755 = vpop.permute.xlu0 %1754
        %1756 = vrot.lane.b32.xlu0 %v1675, 28
        %v1757 = vpop.permute.xlu0 %1756
        %1758 = vrot.lane.b32.xlu0 %v1687, 28
        %v1759 = vpop.permute.xlu0 %1758
        %1760 = vrot.lane.b32.xlu0 %v1699, 28
        %v1761 = vpop.permute.xlu0 %1760
        %1762 = vrot.lane.b32.xlu0 %v1711, 28
        %v1763 = vpop.permute.xlu0 %1762
        %1764 = vrot.lane.b32.xlu0 %v1723, 28
        %v1765 = vpop.permute.xlu0 %1764
        %1766 = vrot.lane.b32.xlu0 %v1735, 28
        %v1767 = vpop.permute.xlu0 %1766
        %v1784 = vunpack.c.l.b16 %v374
        %v1785 = vunpack.c.l.b16 %v375
        %v1786 = vunpack.c.l.b16 %v376
        %v1787 = vunpack.c.l.b16 %v377
        %v1788 = vunpack.c.l.b16 %v378
        %v1789 = vunpack.c.l.b16 %v379
        %v1790 = vunpack.c.l.b16 %v380
        %v1791 = vunpack.c.l.b16 %v381
        %v1792 = vunpack.c.l.b16 %v382
        %v1793 = vunpack.c.l.b16 %v383
        %v1794 = vunpack.c.l.b16 %v384
        %v1795 = vunpack.c.l.b16 %v385
        %v1796 = vunpack.c.l.b16 %v386
        %v1797 = vunpack.c.l.b16 %v387
        %v1798 = vunpack.c.l.b16 %v388
        %v1799 = vunpack.c.l.b16 %v389
        %v1800 = vpack.c.b16 %v1417, %v1784
        %v1801 = vpack.c.b16 %v1419, %v1785
        %v1802 = vpack.c.b16 %v1421, %v1786
        %v1803 = vpack.c.b16 %v1423, %v1787
        %v1804 = vpack.c.b16 %v1425, %v1788
        %v1805 = vpack.c.b16 %v1427, %v1789
        %v1806 = vpack.c.b16 %v1429, %v1790
        %v1807 = vpack.c.b16 %v1431, %v1791
        %v1808 = vpack.c.b16 %v1433, %v1792
        %v1809 = vpack.c.b16 %v1435, %v1793
        %v1810 = vpack.c.b16 %v1437, %v1794
        %v1811 = vpack.c.b16 %v1439, %v1795
        %v1812 = vpack.c.b16 %v1441, %v1796
        %v1813 = vpack.c.b16 %v1443, %v1797
        %v1814 = vpack.c.b16 %v1445, %v1798
        %v1815 = vpack.c.b16 %v1447, %v1799
        %v1816 = vrot.slane %v1800, 1
        %v1817 = vrot.slane %v1528, 1
        %v1818 = vsel %vm791, %v1816, %v1817
        %v1819 = vrot.slane %v1801, 1
        %v1820 = vrot.slane %v1529, 1
        %v1821 = vsel %vm791, %v1819, %v1820
        %v1822 = vrot.slane %v1802, 1
        %v1823 = vrot.slane %v1530, 1
        %v1824 = vsel %vm791, %v1822, %v1823
        %v1825 = vrot.slane %v1803, 1
        %v1826 = vrot.slane %v1531, 1
        %v1827 = vsel %vm791, %v1825, %v1826
        %v1828 = vrot.slane %v1804, 1
        %v1829 = vrot.slane %v1532, 1
        %v1830 = vsel %vm791, %v1828, %v1829
        %v1831 = vrot.slane %v1805, 1
        %v1832 = vrot.slane %v1533, 1
        %v1833 = vsel %vm791, %v1831, %v1832
        %v1834 = vrot.slane %v1806, 1
        %v1835 = vrot.slane %v1534, 1
        %v1836 = vsel %vm791, %v1834, %v1835
        %v1837 = vrot.slane %v1807, 1
        %v1838 = vrot.slane %v1535, 1
        %v1839 = vsel %vm791, %v1837, %v1838
        %v1840 = vrot.slane %v1808, 1
        %v1841 = vrot.slane %v1536, 1
        %v1842 = vsel %vm791, %v1840, %v1841
        %v1843 = vrot.slane %v1809, 1
        %v1844 = vrot.slane %v1537, 1
        %v1845 = vsel %vm791, %v1843, %v1844
        %v1846 = vrot.slane %v1810, 1
        %v1847 = vrot.slane %v1538, 1
        %v1848 = vsel %vm791, %v1846, %v1847
        %v1849 = vrot.slane %v1811, 1
        %v1850 = vrot.slane %v1539, 1
        %v1851 = vsel %vm791, %v1849, %v1850
        %v1852 = vrot.slane %v1812, 1
        %v1853 = vrot.slane %v1540, 1
        %v1854 = vsel %vm791, %v1852, %v1853
        %v1855 = vrot.slane %v1813, 1
        %v1856 = vrot.slane %v1541, 1
        %v1857 = vsel %vm791, %v1855, %v1856
        %v1858 = vrot.slane %v1814, 1
        %v1859 = vrot.slane %v1542, 1
        %v1860 = vsel %vm791, %v1858, %v1859
        %v1861 = vrot.slane %v1815, 1
        %v1862 = vrot.slane %v1543, 1
        %v1863 = vsel %vm791, %v1861, %v1862
        %1864 = vrot.lane.b32.xlu0 %v1818, 32
        %v1865 = vpop.permute.xlu0 %1864
        %1866 = vrot.lane.b32.xlu0 %v1821, 32
        %v1867 = vpop.permute.xlu0 %1866
        %1868 = vrot.lane.b32.xlu0 %v1824, 32
        %v1869 = vpop.permute.xlu0 %1868
        %1870 = vrot.lane.b32.xlu0 %v1827, 32
        %v1871 = vpop.permute.xlu0 %1870
        %1872 = vrot.lane.b32.xlu0 %v1830, 32
        %v1873 = vpop.permute.xlu0 %1872
        %1874 = vrot.lane.b32.xlu0 %v1833, 32
        %v1875 = vpop.permute.xlu0 %1874
        %1876 = vrot.lane.b32.xlu0 %v1836, 32
        %v1877 = vpop.permute.xlu0 %1876
        %1878 = vrot.lane.b32.xlu0 %v1839, 32
        %v1879 = vpop.permute.xlu0 %1878
        %1880 = vrot.lane.b32.xlu0 %v1842, 32
        %v1881 = vpop.permute.xlu0 %1880
        %1882 = vrot.lane.b32.xlu0 %v1845, 32
        %v1883 = vpop.permute.xlu0 %1882
        %1884 = vrot.lane.b32.xlu0 %v1848, 32
        %v1885 = vpop.permute.xlu0 %1884
        %1886 = vrot.lane.b32.xlu0 %v1851, 32
        %v1887 = vpop.permute.xlu0 %1886
        %1888 = vrot.lane.b32.xlu0 %v1854, 32
        %v1889 = vpop.permute.xlu0 %1888
        %1890 = vrot.lane.b32.xlu0 %v1857, 32
        %v1891 = vpop.permute.xlu0 %1890
        %1892 = vrot.lane.b32.xlu0 %v1860, 32
        %v1893 = vpop.permute.xlu0 %1892
        %1894 = vrot.lane.b32.xlu0 %v1863, 32
        %v1895 = vpop.permute.xlu0 %1894
        %vm1896 = vcmask 31744
        %v1898 = vsel %vm1896, %v454, %v712
        %v1900 = vsel %vm1896, %v455, %v714
        %v1902 = vsel %vm1896, %v456, %v716
        %v1904 = vsel %vm1896, %v457, %v718
        %v1906 = vsel %vm1896, %v458, %v720
        %v1908 = vsel %vm1896, %v459, %v722
        %v1910 = vsel %vm1896, %v460, %v724
        %v1912 = vsel %vm1896, %v461, %v726
        %v1914 = vsel %vm1896, %v462, %v728
        %v1916 = vsel %vm1896, %v463, %v730
        %v1918 = vsel %vm1896, %v464, %v732
        %v1920 = vsel %vm1896, %v465, %v734
        %v1922 = vsel %vm1896, %v466, %v736
        %v1924 = vsel %vm1896, %v467, %v738
        %v1926 = vsel %vm1896, %v468, %v740
        %v1928 = vsel %vm1896, %v469, %v742
        %vm1929 = vcmask 64512
        %v1931 = vsel %vm1929, %v1898, %v841
        %v1933 = vsel %vm1929, %v1900, %v843
        %v1935 = vsel %vm1929, %v1902, %v845
        %v1937 = vsel %vm1929, %v1904, %v847
        %v1939 = vsel %vm1929, %v1906, %v849
        %v1941 = vsel %vm1929, %v1908, %v851
        %v1943 = vsel %vm1929, %v1910, %v853
        %v1945 = vsel %vm1929, %v1912, %v855
        %v1947 = vsel %vm1929, %v1914, %v857
        %v1949 = vsel %vm1929, %v1916, %v859
        %v1951 = vsel %vm1929, %v1918, %v861
        %v1953 = vsel %vm1929, %v1920, %v863
        %v1955 = vsel %vm1929, %v1922, %v865
        %v1957 = vsel %vm1929, %v1924, %v867
        %v1959 = vsel %vm1929, %v1926, %v869
        %v1961 = vsel %vm1929, %v1928, %v871
        %vm1962 = vcmask 97280
        %v1964 = vsel %vm1962, %v1931, %v953
        %v1966 = vsel %vm1962, %v1933, %v955
        %v1968 = vsel %vm1962, %v1935, %v957
        %v1970 = vsel %vm1962, %v1937, %v959
        %v1972 = vsel %vm1962, %v1939, %v961
        %v1974 = vsel %vm1962, %v1941, %v963
        %v1976 = vsel %vm1962, %v1943, %v965
        %v1978 = vsel %vm1962, %v1945, %v967
        %v1980 = vsel %vm1962, %v1947, %v969
        %v1982 = vsel %vm1962, %v1949, %v971
        %v1984 = vsel %vm1962, %v1951, %v973
        %v1986 = vsel %vm1962, %v1953, %v975
        %v1988 = vsel %vm1962, %v1955, %v977
        %v1990 = vsel %vm1962, %v1957, %v979
        %v1992 = vsel %vm1962, %v1959, %v981
        %v1994 = vsel %vm1962, %v1961, %v983
        %vm1995 = vcmask 130048
        %v1997 = vsel %vm1995, %v1964, %v1225
        %v1999 = vsel %vm1995, %v1966, %v1227
        %v2001 = vsel %vm1995, %v1968, %v1229
        %v2003 = vsel %vm1995, %v1970, %v1231
        %v2005 = vsel %vm1995, %v1972, %v1233
        %v2007 = vsel %vm1995, %v1974, %v1235
        %v2009 = vsel %vm1995, %v1976, %v1237
        %v2011 = vsel %vm1995, %v1978, %v1239
        %v2013 = vsel %vm1995, %v1980, %v1241
        %v2015 = vsel %vm1995, %v1982, %v1243
        %v2017 = vsel %vm1995, %v1984, %v1245
        %v2019 = vsel %vm1995, %v1986, %v1247
        %v2021 = vsel %vm1995, %v1988, %v1249
        %v2023 = vsel %vm1995, %v1990, %v1251
        %v2025 = vsel %vm1995, %v1992, %v1253
        %v2027 = vsel %vm1995, %v1994, %v1255
        %vm2028 = vcmask 162816
        %v2030 = vsel %vm2028, %v1997, %v1353
        %v2032 = vsel %vm2028, %v1999, %v1355
        %v2034 = vsel %vm2028, %v2001, %v1357
        %v2036 = vsel %vm2028, %v2003, %v1359
        %v2038 = vsel %vm2028, %v2005, %v1361
        %v2040 = vsel %vm2028, %v2007, %v1363
        %v2042 = vsel %vm2028, %v2009, %v1365
        %v2044 = vsel %vm2028, %v2011, %v1367
        %v2046 = vsel %vm2028, %v2013, %v1369
        %v2048 = vsel %vm2028, %v2015, %v1371
        %v2050 = vsel %vm2028, %v2017, %v1373
        %v2052 = vsel %vm2028, %v2019, %v1375
        %v2054 = vsel %vm2028, %v2021, %v1377
        %v2056 = vsel %vm2028, %v2023, %v1379
        %v2058 = vsel %vm2028, %v2025, %v1381
        %v2060 = vsel %vm2028, %v2027, %v1383
        %vm2061 = vcmask 195584
        %v2063 = vsel %vm2061, %v2030, %v1465
        %v2065 = vsel %vm2061, %v2032, %v1467
        %v2067 = vsel %vm2061, %v2034, %v1469
        %v2069 = vsel %vm2061, %v2036, %v1471
        %v2071 = vsel %vm2061, %v2038, %v1473
        %v2073 = vsel %vm2061, %v2040, %v1475
        %v2075 = vsel %vm2061, %v2042, %v1477
        %v2077 = vsel %vm2061, %v2044, %v1479
        %v2079 = vsel %vm2061, %v2046, %v1481
        %v2081 = vsel %vm2061, %v2048, %v1483
        %v2083 = vsel %vm2061, %v2050, %v1485
        %v2085 = vsel %vm2061, %v2052, %v1487
        %v2087 = vsel %vm2061, %v2054, %v1489
        %v2089 = vsel %vm2061, %v2056, %v1491
        %v2091 = vsel %vm2061, %v2058, %v1493
        %v2093 = vsel %vm2061, %v2060, %v1495
        %vm2094 = vcmask 228352
        %v2096 = vsel %vm2094, %v2063, %v1737
        %v2098 = vsel %vm2094, %v2065, %v1739
        %v2100 = vsel %vm2094, %v2067, %v1741
        %v2102 = vsel %vm2094, %v2069, %v1743
        %v2104 = vsel %vm2094, %v2071, %v1745
        %v2106 = vsel %vm2094, %v2073, %v1747
        %v2108 = vsel %vm2094, %v2075, %v1749
        %v2110 = vsel %vm2094, %v2077, %v1751
        %v2112 = vsel %vm2094, %v2079, %v1753
        %v2114 = vsel %vm2094, %v2081, %v1755
        %v2116 = vsel %vm2094, %v2083, %v1757
        %v2118 = vsel %vm2094, %v2085, %v1759
        %v2120 = vsel %vm2094, %v2087, %v1761
        %v2122 = vsel %vm2094, %v2089, %v1763
        %v2124 = vsel %vm2094, %v2091, %v1765
        %v2126 = vsel %vm2094, %v2093, %v1767
        %vm2127 = vcmask 261120
        %v2129 = vsel %vm2127, %v2096, %v1865
        %v2131 = vsel %vm2127, %v2098, %v1867
        %v2133 = vsel %vm2127, %v2100, %v1869
        %v2135 = vsel %vm2127, %v2102, %v1871
        %v2137 = vsel %vm2127, %v2104, %v1873
        %v2139 = vsel %vm2127, %v2106, %v1875
        %v2141 = vsel %vm2127, %v2108, %v1877
        %v2143 = vsel %vm2127, %v2110, %v1879
        %v2145 = vsel %vm2127, %v2112, %v1881
        %v2147 = vsel %vm2127, %v2114, %v1883
        %v2149 = vsel %vm2127, %v2116, %v1885
        %v2151 = vsel %vm2127, %v2118, %v1887
        %v2153 = vsel %vm2127, %v2120, %v1889
        %v2155 = vsel %vm2127, %v2122, %v1891
        %v2157 = vsel %vm2127, %v2124, %v1893
        %v2159 = vsel %vm2127, %v2126, %v1895
        %vm2160 = vcmask 293888
        %v2162 = vsel %vm2160, %v2129, 0
        %v2164 = vsel %vm2160, %v2131, 0
        %v2166 = vsel %vm2160, %v2133, 0
        %v2168 = vsel %vm2160, %v2135, 0
        %v2170 = vsel %vm2160, %v2137, 0
        %v2172 = vsel %vm2160, %v2139, 0
        %v2174 = vsel %vm2160, %v2141, 0
        %v2176 = vsel %vm2160, %v2143, 0
        %v2178 = vsel %vm2160, %v2145, 0
        %v2180 = vsel %vm2160, %v2147, 0
        %v2182 = vsel %vm2160, %v2149, 0
        %v2184 = vsel %vm2160, %v2151, 0
        %v2186 = vsel %vm2160, %v2153, 0
        %v2188 = vsel %vm2160, %v2155, 0
        %v2190 = vsel %vm2160, %v2157, 0
        %v2192 = vsel %vm2160, %v2159, 0
        %v2194 = vld [vmem:[%s1] sm:$0xf]
        %v2195 = vld [vmem:[%s1 + $0x4] sm:$0xf]
        %v2196 = vld [vmem:[%s1 + $0x8] sm:$0xf]
        %v2197 = vld [vmem:[%s1 + $0xc] sm:$0xf]
        %v2198 = vld [vmem:[%s1 + $0x10] sm:$0xf]
        %v2199 = vld [vmem:[%s1 + $0x14] sm:$0xf]
        %v2200 = vld [vmem:[%s1 + $0x18] sm:$0xf]
        %v2201 = vld [vmem:[%s1 + $0x1c] sm:$0xf]
        %v2202 = vld [vmem:[%s1 + $0x20] sm:$0xf]
        %v2203 = vld [vmem:[%s1 + $0x24] sm:$0xf]
        %v2204 = vld [vmem:[%s1 + $0x28] sm:$0xf]
        %v2205 = vld [vmem:[%s1 + $0x2c] sm:$0xf]
        %v2206 = vld [vmem:[%s1 + $0x30] sm:$0xf]
        %v2207 = vld [vmem:[%s1 + $0x34] sm:$0xf]
        %v2208 = vld [vmem:[%s1 + $0x38] sm:$0xf]
        %v2209 = vld [vmem:[%s1 + $0x3c] sm:$0xf]
        %v2210 = vld [vmem:[%s2] sm:$0x1]
        %v2212 = vlaneseq
        %v2213 = vshrl.u32 %v2212, 7
        %v2214 = vsub.s32 0, %v2213
        %v2215 = vrot.slane %v2210, %v2214
        %v2233 = vunpack.c.l.b16 %v2194
        %v2234 = vunpack.c.l.b16 %v2195
        %v2235 = vunpack.c.l.b16 %v2196
        %v2236 = vunpack.c.l.b16 %v2197
        %v2237 = vunpack.c.l.b16 %v2198
        %v2238 = vunpack.c.l.b16 %v2199
        %v2239 = vunpack.c.l.b16 %v2200
        %v2240 = vunpack.c.l.b16 %v2201
        %v2241 = vunpack.c.l.b16 %v2202
        %v2242 = vunpack.c.l.b16 %v2203
        %v2243 = vunpack.c.l.b16 %v2204
        %v2244 = vunpack.c.l.b16 %v2205
        %v2245 = vunpack.c.l.b16 %v2206
        %v2246 = vunpack.c.l.b16 %v2207
        %v2247 = vunpack.c.l.b16 %v2208
        %v2248 = vunpack.c.l.b16 %v2209
        %v2249 = vpack.c.b16 %v2234, %v2233
        %v2250 = vpack.c.b16 %v2236, %v2235
        %v2251 = vpack.c.b16 %v2238, %v2237
        %v2252 = vpack.c.b16 %v2240, %v2239
        %v2253 = vpack.c.b16 %v2242, %v2241
        %v2254 = vpack.c.b16 %v2244, %v2243
        %v2255 = vpack.c.b16 %v2246, %v2245
        %v2256 = vpack.c.b16 %v2248, %v2247
        %2265 = vmatprep.subr.bf16.mxu0 0
        %2266 = vmatpush1.bf16.msra.mxu0 %v2249
        %2267 = vmatprep.subr.bf16.mxu0 0
        %2268 = vmatpush1.bf16.msra.mxu0 %v2250
        %2269 = vmatprep.subr.bf16.mxu0 0
        %2270 = vmatpush1.bf16.msra.mxu0 %v2251
        %2271 = vmatprep.subr.bf16.mxu0 0
        %2272 = vmatpush1.bf16.msra.mxu0 %v2252
        %2273 = vmatprep.subr.bf16.mxu0 0
        %2274 = vmatpush1.bf16.msra.mxu0 %v2253
        %2275 = vmatprep.subr.bf16.mxu0 0
        %2276 = vmatpush1.bf16.msra.mxu0 %v2254
        %2277 = vmatprep.subr.bf16.mxu0 0
        %2278 = vmatpush1.bf16.msra.mxu0 %v2255
        %2279 = vmatprep.subr.bf16.mxu0 0
        %2280 = vmatpush1.bf16.msra.mxu0 %v2256
        %2281 = vmatprep.subr.bf16.mxu0 0
        %2282 = vmatpush1.bf16.msra.mxu0 0
        %2283 = vmatprep.subr.bf16.mxu0 0
        %2284 = vmatpush1.bf16.msra.mxu0 0
        %2285 = vmatprep.subr.bf16.mxu0 0
        %2286 = vmatpush1.bf16.msra.mxu0 0
        %2287 = vmatprep.subr.bf16.mxu0 0
        %2288 = vmatpush1.bf16.msra.mxu0 0
        %2289 = vmatprep.subr.bf16.mxu0 0
        %2290 = vmatpush1.bf16.msra.mxu0 0
        %2291 = vmatprep.subr.bf16.mxu0 0
        %2292 = vmatpush1.bf16.msra.mxu0 0
        %2293 = vmatprep.subr.bf16.mxu0 0
        %2294 = vmatpush1.bf16.msra.mxu0 0
        %2295 = vmatprep.subr.bf16.mxu0 0
        %2296 = vmatpush1.bf16.msra.mxu0 0
        %2297 = vmatprep.mubr.bf16.mxu0 0
        %2298 = vmatmul.mubr.bf16.gmra.mrb[0].mxu0 %v2162
        %v2299 = vpop.f32.mrb[0].mxu0
        %v2300 = vadd.f32 %v2215, %v2299
        %v2301 = vpop.f32.mrb[0].mxu0
        %v2302 = vpop.f32.mrb[0].mxu0
        %v2303 = vadd.f32 %v2215, %v2302
        %v2304 = vpop.f32.mrb[0].mxu0
        %2305 = vmatprep.mubr.bf16.mxu0 0
        %2306 = vmatmul.mubr.bf16.gmra.mrb[0].mxu0 %v2164
        %v2307 = vpop.f32.mrb[0].mxu0
        %v2308 = vadd.f32 %v2215, %v2307
        %v2309 = vpop.f32.mrb[0].mxu0
        %v2310 = vpop.f32.mrb[0].mxu0
        %v2311 = vadd.f32 %v2215, %v2310
        %v2312 = vpop.f32.mrb[0].mxu0
        %2313 = vmatprep.mubr.bf16.mxu0 0
        %2314 = vmatmul.mubr.bf16.gmra.mrb[0].mxu0 %v2166
        %v2315 = vpop.f32.mrb[0].mxu0
        %v2316 = vadd.f32 %v2215, %v2315
        %v2317 = vpop.f32.mrb[0].mxu0
        %v2318 = vpop.f32.mrb[0].mxu0
        %v2319 = vadd.f32 %v2215, %v2318
        %v2320 = vpop.f32.mrb[0].mxu0
        %2321 = vmatprep.mubr.bf16.mxu0 0
        %2322 = vmatmul.mubr.bf16.gmra.mrb[0].mxu0 %v2168
        %v2323 = vpop.f32.mrb[0].mxu0
        %v2324 = vadd.f32 %v2215, %v2323
        %v2325 = vpop.f32.mrb[0].mxu0
        %v2326 = vpop.f32.mrb[0].mxu0
        %v2327 = vadd.f32 %v2215, %v2326
        %v2328 = vpop.f32.mrb[0].mxu0
        %2329 = vmatprep.mubr.bf16.mxu0 0
        %2330 = vmatmul.mubr.bf16.gmra.mrb[0].mxu0 %v2170
        %v2331 = vpop.f32.mrb[0].mxu0
        %v2332 = vadd.f32 %v2215, %v2331
        %v2333 = vpop.f32.mrb[0].mxu0
        %v2334 = vpop.f32.mrb[0].mxu0
        %v2335 = vadd.f32 %v2215, %v2334
        %v2336 = vpop.f32.mrb[0].mxu0
        %2337 = vmatprep.mubr.bf16.mxu0 0
        %2338 = vmatmul.mubr.bf16.gmra.mrb[0].mxu0 %v2172
        %v2339 = vpop.f32.mrb[0].mxu0
        %v2340 = vadd.f32 %v2215, %v2339
        %v2341 = vpop.f32.mrb[0].mxu0
        %v2342 = vpop.f32.mrb[0].mxu0
        %v2343 = vadd.f32 %v2215, %v2342
        %v2344 = vpop.f32.mrb[0].mxu0
        %2345 = vmatprep.mubr.bf16.mxu0 0
        %2346 = vmatmul.mubr.bf16.gmra.mrb[0].mxu0 %v2174
        %v2347 = vpop.f32.mrb[0].mxu0
        %v2348 = vadd.f32 %v2215, %v2347
        %v2349 = vpop.f32.mrb[0].mxu0
        %v2350 = vpop.f32.mrb[0].mxu0
        %v2351 = vadd.f32 %v2215, %v2350
        %v2352 = vpop.f32.mrb[0].mxu0
        %2353 = vmatprep.mubr.bf16.mxu0 0
        %2354 = vmatmul.mubr.bf16.gmra.mrb[0].mxu0 %v2176
        %v2355 = vpop.f32.mrb[0].mxu0
        %v2356 = vadd.f32 %v2215, %v2355
        %v2357 = vpop.f32.mrb[0].mxu0
        %v2358 = vpop.f32.mrb[0].mxu0
        %v2359 = vadd.f32 %v2215, %v2358
        %v2360 = vpop.f32.mrb[0].mxu0
        %2361 = vmatprep.mubr.bf16.mxu0 0
        %2362 = vmatmul.mubr.bf16.gmra.mrb[0].mxu0 %v2178
        %v2363 = vpop.f32.mrb[0].mxu0
        %v2364 = vadd.f32 %v2215, %v2363
        %v2365 = vpop.f32.mrb[0].mxu0
        %v2366 = vpop.f32.mrb[0].mxu0
        %v2367 = vadd.f32 %v2215, %v2366
        %v2368 = vpop.f32.mrb[0].mxu0
        %2369 = vmatprep.mubr.bf16.mxu0 0
        %2370 = vmatmul.mubr.bf16.gmra.mrb[0].mxu0 %v2180
        %v2371 = vpop.f32.mrb[0].mxu0
        %v2372 = vadd.f32 %v2215, %v2371
        %v2373 = vpop.f32.mrb[0].mxu0
        %v2374 = vpop.f32.mrb[0].mxu0
        %v2375 = vadd.f32 %v2215, %v2374
        %v2376 = vpop.f32.mrb[0].mxu0
        %2377 = vmatprep.mubr.bf16.mxu0 0
        %2378 = vmatmul.mubr.bf16.gmra.mrb[0].mxu0 %v2182
        %v2379 = vpop.f32.mrb[0].mxu0
        %v2380 = vadd.f32 %v2215, %v2379
        %v2381 = vpop.f32.mrb[0].mxu0
        %v2382 = vpop.f32.mrb[0].mxu0
        %v2383 = vadd.f32 %v2215, %v2382
        %v2384 = vpop.f32.mrb[0].mxu0
        %2385 = vmatprep.mubr.bf16.mxu0 0
        %2386 = vmatmul.mubr.bf16.gmra.mrb[0].mxu0 %v2184
        %v2387 = vpop.f32.mrb[0].mxu0
        %v2388 = vadd.f32 %v2215, %v2387
        %v2389 = vpop.f32.mrb[0].mxu0
        %v2390 = vpop.f32.mrb[0].mxu0
        %v2391 = vadd.f32 %v2215, %v2390
        %v2392 = vpop.f32.mrb[0].mxu0
        %2393 = vmatprep.mubr.bf16.mxu0 0
        %2394 = vmatmul.mubr.bf16.gmra.mrb[0].mxu0 %v2186
        %v2395 = vpop.f32.mrb[0].mxu0
        %v2396 = vadd.f32 %v2215, %v2395
        %v2397 = vpop.f32.mrb[0].mxu0
        %v2398 = vpop.f32.mrb[0].mxu0
        %v2399 = vadd.f32 %v2215, %v2398
        %v2400 = vpop.f32.mrb[0].mxu0
        %2401 = vmatprep.mubr.bf16.mxu0 0
        %2402 = vmatmul.mubr.bf16.gmra.mrb[0].mxu0 %v2188
        %v2403 = vpop.f32.mrb[0].mxu0
        %v2404 = vadd.f32 %v2215, %v2403
        %v2405 = vpop.f32.mrb[0].mxu0
        %v2406 = vpop.f32.mrb[0].mxu0
        %v2407 = vadd.f32 %v2215, %v2406
        %v2408 = vpop.f32.mrb[0].mxu0
        %2409 = vmatprep.mubr.bf16.mxu0 0
        %2410 = vmatmul.mubr.bf16.gmra.mrb[0].mxu0 %v2190
        %v2411 = vpop.f32.mrb[0].mxu0
        %v2412 = vadd.f32 %v2215, %v2411
        %v2413 = vpop.f32.mrb[0].mxu0
        %v2414 = vpop.f32.mrb[0].mxu0
        %v2415 = vadd.f32 %v2215, %v2414
        %v2416 = vpop.f32.mrb[0].mxu0
        %2417 = vmatprep.mubr.bf16.mxu0 0
        %2418 = vmatmul.mubr.bf16.gmra.mrb[0].mxu0 %v2192
        %v2419 = vpop.f32.mrb[0].mxu0
        %v2420 = vadd.f32 %v2215, %v2419
        %v2421 = vpop.f32.mrb[0].mxu0
        %v2422 = vpop.f32.mrb[0].mxu0
        %v2423 = vadd.f32 %v2215, %v2422
        %v2424 = vpop.f32.mrb[0].mxu0
        %2425 = vdwg.mxu0
        %v2426 = vmax.f32 %v2300, 0.0
        %v2427 = vmax.f32 %v2303, 0.0
        %v2428 = vmax.f32 %v2308, 0.0
        %v2429 = vmax.f32 %v2311, 0.0
        %v2430 = vmax.f32 %v2316, 0.0
        %v2431 = vmax.f32 %v2319, 0.0
        %v2432 = vmax.f32 %v2324, 0.0
        %v2433 = vmax.f32 %v2327, 0.0
        %v2434 = vmax.f32 %v2332, 0.0
        %v2435 = vmax.f32 %v2335, 0.0
        %v2436 = vmax.f32 %v2340, 0.0
        %v2437 = vmax.f32 %v2343, 0.0
        %v2438 = vmax.f32 %v2348, 0.0
        %v2439 = vmax.f32 %v2351, 0.0
        %v2440 = vmax.f32 %v2356, 0.0
        %v2441 = vmax.f32 %v2359, 0.0
        %v2442 = vmax.f32 %v2364, 0.0
        %v2443 = vmax.f32 %v2367, 0.0
        %v2444 = vmax.f32 %v2372, 0.0
        %v2445 = vmax.f32 %v2375, 0.0
        %v2446 = vmax.f32 %v2380, 0.0
        %v2447 = vmax.f32 %v2383, 0.0
        %v2448 = vmax.f32 %v2388, 0.0
        %v2449 = vmax.f32 %v2391, 0.0
        %v2450 = vmax.f32 %v2396, 0.0
        %v2451 = vmax.f32 %v2399, 0.0
        %v2452 = vmax.f32 %v2404, 0.0
        %v2453 = vmax.f32 %v2407, 0.0
        %v2454 = vmax.f32 %v2412, 0.0
        %v2455 = vmax.f32 %v2415, 0.0
        %v2456 = vmax.f32 %v2420, 0.0
        %v2457 = vmax.f32 %v2423, 0.0
        %2458 = vst [vmem:[%s177] sm:$0xff] %v2426
        %2459 = vst [vmem:[%s177 + $0x8] sm:$0xff] %v2427
        %2460 = vst [vmem:[%s177 + $0x10] sm:$0xff] %v2428
        %2461 = vst [vmem:[%s177 + $0x18] sm:$0xff] %v2429
        %2462 = vst [vmem:[%s177 + $0x20] sm:$0xff] %v2430
        %2463 = vst [vmem:[%s177 + $0x28] sm:$0xff] %v2431
        %2464 = vst [vmem:[%s177 + $0x30] sm:$0xff] %v2432
        %2465 = vst [vmem:[%s177 + $0x38] sm:$0xff] %v2433
        %2466 = vst [vmem:[%s177 + $0x40] sm:$0xff] %v2434
        %2467 = vst [vmem:[%s177 + $0x48] sm:$0xff] %v2435
        %2468 = vst [vmem:[%s177 + $0x50] sm:$0xff] %v2436
        %2469 = vst [vmem:[%s177 + $0x58] sm:$0xff] %v2437
        %2470 = vst [vmem:[%s177 + $0x60] sm:$0xff] %v2438
        %2471 = vst [vmem:[%s177 + $0x68] sm:$0xff] %v2439
        %2472 = vst [vmem:[%s177 + $0x70] sm:$0xff] %v2440
        %2473 = vst [vmem:[%s177 + $0x78] sm:$0xff] %v2441
        %2474 = vst [vmem:[%s177 + $0x80] sm:$0xff] %v2442
        %2475 = vst [vmem:[%s177 + $0x88] sm:$0xff] %v2443
        %2476 = vst [vmem:[%s177 + $0x90] sm:$0xff] %v2444
        %2477 = vst [vmem:[%s177 + $0x98] sm:$0xff] %v2445
        %2478 = vst [vmem:[%s177 + $0xa0] sm:$0xff] %v2446
        %2479 = vst [vmem:[%s177 + $0xa8] sm:$0xff] %v2447
        %2480 = vst [vmem:[%s177 + $0xb0] sm:$0xff] %v2448
        %2481 = vst [vmem:[%s177 + $0xb8] sm:$0xff] %v2449
        %2482 = vst [vmem:[%s177 + $0xc0] sm:$0xff] %v2450
        %2483 = vst [vmem:[%s177 + $0xc8] sm:$0xff] %v2451
        %2484 = vst [vmem:[%s177 + $0xd0] sm:$0xff] %v2452
        %2485 = vst [vmem:[%s177 + $0xd8] sm:$0xff] %v2453
        %2486 = vst [vmem:[%s177 + $0xe0] sm:$0xff] %v2454
        %2487 = vst [vmem:[%s177 + $0xe8] sm:$0xff] %v2455
        %2488 = vst [vmem:[%s177 + $0xf0] sm:$0xff] %v2456
        %2489 = vst [vmem:[%s177 + $0xf8] sm:$0xff] %v2457
        %s2490 = sand.u32 %s107, 1
        %s2491 = scalar_lea.sflag [#allocation3], %s2490
        %s2492 = sand.u32 %s107, 1
        %s2493 = smul.addr %s2492, 256
        %s2494 = scalar_lea.vmem [#allocation2], %s2493
        // Predicated region
        $region33: #{_lambda_.1} parent=31 // pred_check
          %p2495 = pneg %p117
        $region34: #{_lambda_.1} parent=31 // pred_check_branch
          %2497 = sbr.rel (%p2495) target = $region36
        $region35: #{_lambda_.1} parent=31 // pred_region
          %s2498 = sadd.s32 %s21, %s22
          %s2499 = smul.u32 32, %s2498
          %s2501 = ssub.s32 4096, 4096
          %2502 = vsyncadd %s2491, %s2501
          %s2503 = smul.addr %s2499, 128
          %s2504 = scalar_lea.hbm %s3, %s2503
          %s2505 = sshll.u32 %s2494, 4
          %s2506 = int_to_ptr.vmem [resolvable:$true] %s2505
          %2511 = dma.vmem_to_hbm [thread:$0]  %s2506, 4096, %s2504, %s2491, 128, 128, 8
        $region36: #{_lambda_.1} parent=31 // pred_fallthru
          _
      $region32: #{_lambda_.1} parent=5 // pred_fallthru
        _
      %p2512 = scmp.le.s32.totalorder 2, %s12
      // Predicated region
      $region37: #{_lambda_.1} parent=5 // pred_check
        %p2513 = pneg %p2512
      $region38: #{_lambda_.1} parent=5 // pred_check_branch
        %2515 = sbr.rel (%p2513) target = $region40
      $region39: #{_lambda_.1} parent=5 // pred_region
        %s2516 = ssub.s32 %s12, 2
        // Predicated region
        $region41: #{_lambda_.1} parent=39 // pred_check
          %p2517 = pneg %p123
        $region42: #{_lambda_.1} parent=39 // pred_check_branch
          %2519 = sbr.rel (%p2517) target = $region44
        $region43: #{_lambda_.1} parent=39 // pred_region
          %s2520 = sand.u32 %s108, 1
          %s2521 = scalar_lea.sflag [#allocation3], %s2520
          %s2522 = sand.u32 %s108, 1
          %s2523 = smul.addr %s2522, 256
          %s2524 = scalar_lea.vmem [#allocation2], %s2523
          %2525 = dma.done %s2521, 4096
        $region44: #{_lambda_.1} parent=39 // pred_fallthru
          _
      $region40: #{_lambda_.1} parent=5 // pred_fallthru
        _
    $region6: #{_lambda_.1} parent=1 // loop_footer
      %s16 = sadd.s32 1, %s12
    $region7: #{_lambda_.1} parent=1 // loop_footer_branch
      %11 = sbr.rel target = $region3
    $region8: #{_lambda_.1} parent=1 // loop_exit
      _
    %2526 = vsyncpa [#allocation3], 1
    %s2527 = scalar_lea.sflag [#allocation3], 1
    %2528 = vsyncpa %s2527, 1

</llo_original>
